<compile_context>
chip_gen: v7x
topology: tpu7x:2x2x1
jax: 0.10.0
libtpu: 0.0.40
codegen_flags: <defaults>
</compile_context>

<pallas_src>
import jax
import jax.numpy as jnp
from jax import lax
from jax.experimental import pallas as pl
from jax.experimental.pallas import tpu as pltpu


def _round_up(x, m):
    return (x + m - 1) // m * m


def _vmem_capacity_bytes():
    try:
        cap = getattr(pltpu.get_tpu_info(), "vmem_capacity_bytes", None)
        if cap:
            return int(cap)
    except Exception:
        pass
    return 64 * 1024 * 1024  # conservative (v7x per-core) default


def _pick_row_tile(B, H, W, C, s, x_bytes, out_bytes, vmem_limit,
                   max_unrolled_stores=512):
    """Pick rows-of-H per grid step for the fused conv+shuffle kernel."""
    s2 = s * s
    # Resident VMEM: weight (double-buffered even with a constant index_map)
    # plus the sublane/lane-padded bias block.
    resident = 2 * C * s2 * x_bytes + 2 * 8 * _round_up(s2, 128) * 4
    budget = max(1 << 20, vmem_limit // 2 - resident - (2 << 20))

    def tile_bytes(th):
        tn = th * W
        return (2 * C * tn * x_bytes                              # input (x2 buffers)
                + 2 * th * s * _round_up(W, 8) * 128 * out_bytes  # output (x2, lane-padded)
                + tn * _round_up(s2, 128) * 4)                    # f32 accumulator value

    # th must divide H, and th*W must be a multiple of 128 (lane-dense input
    # block) unless th == H (a full-extent block is always legal).
    cands = [d for d in range(1, H + 1)
             if H % d == 0 and ((d * W) % 128 == 0 or d == H)]
    capped = [d for d in cands if d * s <= max_unrolled_stores]
    if capped:
        cands = capped
    if not cands:
        cands = [H]
    fitting = [d for d in cands if tile_bytes(d) <= budget] or [min(cands)]
    th = max(fitting)
    if B == 1:
        # Keep >= 2 grid steps so both v7x TensorCores get work.
        split = [d for d in fitting if d < H]
        if split:
            th = max(split)
    return th, resident + tile_bytes(th)


def _make_fused_kernel(s, th, W):
    """1x1 conv + PixelShuffle for one (batch, row-tile) grid step."""

    def kernel(x_ref, wt_ref, b_ref, o_ref):
        # x_ref : (C, th*W)      activations; pixel index p = h*W + w on lanes
        # wt_ref: (C, s*s)       transposed conv weight (resident)
        # b_ref : (1, s*s)       conv bias (f32, resident)
        # o_ref : (th, s, W, s)  pixel-shuffled output rows for this tile
        acc = lax.dot_general(
            x_ref[...], wt_ref[...],
            dimension_numbers=(((0,), (0,)), ((), ())),
            preferred_element_type=jnp.float32)              # (th*W, s*s) = [(h,w), (i,j)]
        acc = (acc + b_ref[...]).astype(o_ref.dtype)
        # Scatter into the shuffled layout: o[h, i, w, j] = acc[h*W + w, i*s + j].
        # Pure static, tile-aligned slices -> plain stores (no relayout).
        for h in range(th):
            rows = acc[h * W:(h + 1) * W, :]                 # (W, s*s)
            for i in range(s):
                o_ref[h, i, :, :] = rows[:, i * s:(i + 1) * s]

    return kernel


def seg_head_forward(feature, weight, bias, encoder_stride):
    """SegHead.forward: Conv2d(C -> s^2, k=1) followed by PixelShuffle(s).

    feature: (B, C, H, W)
    weight:  (s^2, C)   (Conv2d 1x1 weight with the spatial dims squeezed)
    bias:    (s^2,)
    returns: (B, 1, H*s, W*s) in feature.dtype
    """
    s = int(encoder_stride)
    s2 = s * s
    B, C, H, W = feature.shape
    assert weight.shape == (s2, C)

    if s == 1:
        # PixelShuffle(1) is the identity.
        y = jnp.einsum("bchw,oc->bohw", feature, weight.astype(feature.dtype))
        return y + bias.astype(y.dtype)[None, :, None, None]

    if W % 8 != 0:
        # TODO(synk): odd widths (W % 8 != 0) fall back to XLA; the fused
        # Pallas path assumes sublane-aligned W for its tile-aligned stores.
        conv = (jnp.einsum("bchw,oc->bohw", feature.astype(jnp.float32),
                           weight.astype(jnp.float32))
                + bias.astype(jnp.float32)[None, :, None, None])
        y = conv.reshape(B, s, s, H, W).transpose(0, 3, 1, 4, 2)
        return y.reshape(B, 1, H * s, W * s).astype(feature.dtype)

    out_dtype = feature.dtype
    x_bytes = jnp.dtype(feature.dtype).itemsize
    out_bytes = jnp.dtype(out_dtype).itemsize

    vmem_cap = _vmem_capacity_bytes()
    vmem_limit = vmem_cap // 2          # 64 MiB on v5e/v6e, 32 MiB on v7x
    th, vmem_needed = _pick_row_tile(B, H, W, C, s, x_bytes, out_bytes, vmem_limit)
    vmem_limit = max(vmem_limit, min(int(vmem_cap * 0.9), vmem_needed + (4 << 20)))
    n_t = H // th
    tn = th * W

    # Free reshape: NCHW is already contiguous as (B, C, H*W) - no transpose.
    x3d = feature.reshape(B, C, H * W)
    wt = weight.T.astype(feature.dtype)                 # (C, s^2), tiny
    bias2 = bias.reshape(1, s2).astype(jnp.float32)

    kernel = _make_fused_kernel(s, th, W)
    out4 = pl.pallas_call(
        kernel,
        out_shape=jax.ShapeDtypeStruct((B * H, s, W, s), out_dtype),
        grid=(B, n_t),
        in_specs=[
            pl.BlockSpec((None, C, tn), lambda b, t: (b, 0, t)),   # activations
            pl.BlockSpec((C, s2), lambda b, t: (0, 0)),            # weight^T (resident)
            pl.BlockSpec((1, s2), lambda b, t: (0, 0)),            # bias (resident)
        ],
        out_specs=pl.BlockSpec((th, s, W, s),
                               lambda b, t: (b * n_t + t, 0, 0, 0)),
        compiler_params=pltpu.CompilerParams(
            dimension_semantics=("parallel", "parallel"),
            vmem_limit_bytes=int(vmem_limit),
        ),
    )(x3d, wt, bias2)

    # (B*H, s, W, s) is byte-identical to (B, 1, H*s, W*s): free reshape.
    return out4.reshape(B, 1, H * s, W * s)


def _reference(feature, weight, bias, s):
    # Pure-JAX reference: 1x1 conv via einsum + pixel shuffle (f32).
    B, C, H, W = feature.shape
    conv = (jnp.einsum("bchw,oc->bohw", feature.astype(jnp.float32),
                       weight.astype(jnp.float32))
            + bias.astype(jnp.float32)[None, :, None, None])
    y = conv.reshape(B, s, s, H, W).transpose(0, 3, 1, 4, 2)    # (B, H, i, W, j)
    return y.reshape(B, 1, H * s, W * s)


if __name__ == "__main__":
    key = jax.random.PRNGKey(0)
    B, C, H, W = 2, 4, 16, 16
    encoder_stride = 4
    s2 = encoder_stride ** 2

    k1, k2, k3 = jax.random.split(key, 3)
    feature = jax.random.normal(k1, (B, C, H, W), dtype=jnp.float32)
    # Deterministic "conv" parameters (Conv2d(in=C, out=s^2, k=1)).
    weight = jax.random.normal(k2, (s2, C), dtype=jnp.float32) * 0.1
    bias = jax.random.normal(k3, (s2,), dtype=jnp.float32) * 0.1

    ref = _reference(feature, weight, bias, encoder_stride)

    # f32 path (matches the PyTorch module's semantics).
    out = jax.block_until_ready(
        seg_head_forward(feature, weight, bias, encoder_stride))
    assert out.shape == (B, 1, H * encoder_stride, W * encoder_stride)
    assert out.dtype == feature.dtype
    assert jnp.allclose(out, ref, atol=1e-5, rtol=1e-5)

    # bf16 streaming path (halves the dominant HBM stream; f32 MXU accumulate).
    out_bf16 = jax.block_until_ready(
        seg_head_forward(feature.astype(jnp.bfloat16),
                         weight.astype(jnp.bfloat16), bias, encoder_stride))
    assert out_bf16.shape == out.shape
    assert out_bf16.dtype == jnp.bfloat16
    assert jnp.allclose(out_bf16.astype(jnp.float32), ref, atol=3e-2, rtol=3e-2)

    print("KERNEL_OK")
</pallas_src>

<mosaic_0001>
module attributes {stable_mosaic.version = 11 : i64} {
  func.func @kernel(%arg0: i32, %arg1: i32, %arg2: memref<1x4x256xf32, #tpu.memory_space<vmem>>, %arg3: memref<4x16xf32, #tpu.memory_space<vmem>>, %arg4: memref<1x16xf32, #tpu.memory_space<vmem>>, %arg5: memref<16x4x16x4xf32, #tpu.memory_space<vmem>>) attributes {dimension_semantics = [#tpu.dimension_semantics<parallel>, #tpu.dimension_semantics<parallel>], iteration_bounds = array<i64: 2, 1>, scalar_prefetch = 0 : i64, scratch_operands = 0 : i64, tpu.core_type = #tpu.core_type<tc>, window_params = [{transform_indices = @transform_0, window_bounds = array<i64: 1, 4, 256>}, {pipeline_mode = #tpu.pipeline_mode<synchronous>, transform_indices = @transform_1, window_bounds = array<i64: 4, 16>}, {pipeline_mode = #tpu.pipeline_mode<synchronous>, transform_indices = @transform_2, window_bounds = array<i64: 1, 16>}, {transform_indices = @transform_3, window_bounds = array<i64: 16, 4, 16, 4>}]} {
    %c0 = arith.constant 0 : index
    %c0_0 = arith.constant 0 : index
    %c0_1 = arith.constant 0 : index
    %0 = vector.load %arg2[%c0, %c0_0, %c0_1] : memref<1x4x256xf32, #tpu.memory_space<vmem>>, vector<1x4x256xf32>
    %1 = vector.shape_cast %0 : vector<1x4x256xf32> to vector<4x256xf32>
    %c0_2 = arith.constant 0 : index
    %c0_3 = arith.constant 0 : index
    %2 = vector.load %arg3[%c0_2, %c0_3] : memref<4x16xf32, #tpu.memory_space<vmem>>, vector<4x16xf32>
    %cst = arith.constant dense<0.000000e+00> : vector<256x16xf32>
    %3 = tpu.matmul %1, %2, %cst {dimension_numbers = #tpu.dot_dimension_numbers<[0], [0], [1], [1], [0, 1, 1, 1], [], []>} : vector<4x256xf32>, vector<4x16xf32>, vector<256x16xf32> -> vector<256x16xf32>
    %c0_4 = arith.constant 0 : index
    %c0_5 = arith.constant 0 : index
    %4 = vector.load %arg4[%c0_4, %c0_5] : memref<1x16xf32, #tpu.memory_space<vmem>>, vector<1x16xf32>
    %5 = vector.broadcast %4 : vector<1x16xf32> to vector<256x16xf32>
    %6 = arith.addf %3, %5 : vector<256x16xf32>
    %7 = vector.extract_strided_slice %6 {offsets = [0, 0], sizes = [16, 16], strides = [1, 1]} : vector<256x16xf32> to vector<16x16xf32>
    %8 = vector.extract_strided_slice %7 {offsets = [0, 0], sizes = [16, 4], strides = [1, 1]} : vector<16x16xf32> to vector<16x4xf32>
    %c0_6 = arith.constant 0 : index
    %c0_7 = arith.constant 0 : index
    %c0_8 = arith.constant 0 : index
    %c0_9 = arith.constant 0 : index
    %9 = vector.load %arg5[%c0_6, %c0_7, %c0_8, %c0_9] : memref<16x4x16x4xf32, #tpu.memory_space<vmem>>, vector<1x1x16x4xf32>
    %10 = vector.shape_cast %9 : vector<1x1x16x4xf32> to vector<16x4xf32>
    %11 = vector.shape_cast %8 : vector<16x4xf32> to vector<1x1x16x4xf32>
    tpu.vector_store %arg5[%c0_6, %c0_7, %c0_8, %c0_9], %11 {strides = array<i32>} : memref<16x4x16x4xf32, #tpu.memory_space<vmem>>, vector<1x1x16x4xf32>,
    %12 = vector.extract_strided_slice %7 {offsets = [0, 4], sizes = [16, 4], strides = [1, 1]} : vector<16x16xf32> to vector<16x4xf32>
    %c0_10 = arith.constant 0 : index
    %c1 = arith.constant 1 : index
    %c0_11 = arith.constant 0 : index
    %c0_12 = arith.constant 0 : index
    %13 = vector.load %arg5[%c0_10, %c1, %c0_11, %c0_12] : memref<16x4x16x4xf32, #tpu.memory_space<vmem>>, vector<1x1x16x4xf32>
    %14 = vector.shape_cast %13 : vector<1x1x16x4xf32> to vector<16x4xf32>
    %15 = vector.shape_cast %12 : vector<16x4xf32> to vector<1x1x16x4xf32>
    tpu.vector_store %arg5[%c0_10, %c1, %c0_11, %c0_12], %15 {strides = array<i32>} : memref<16x4x16x4xf32, #tpu.memory_space<vmem>>, vector<1x1x16x4xf32>,
    %16 = vector.extract_strided_slice %7 {offsets = [0, 8], sizes = [16, 4], strides = [1, 1]} : vector<16x16xf32> to vector<16x4xf32>
    %c0_13 = arith.constant 0 : index
    %c2 = arith.constant 2 : index
    %c0_14 = arith.constant 0 : index
    %c0_15 = arith.constant 0 : index
    %17 = vector.load %arg5[%c0_13, %c2, %c0_14, %c0_15] : memref<16x4x16x4xf32, #tpu.memory_space<vmem>>, vector<1x1x16x4xf32>
    %18 = vector.shape_cast %17 : vector<1x1x16x4xf32> to vector<16x4xf32>
    %19 = vector.shape_cast %16 : vector<16x4xf32> to vector<1x1x16x4xf32>
    tpu.vector_store %arg5[%c0_13, %c2, %c0_14, %c0_15], %19 {strides = array<i32>} : memref<16x4x16x4xf32, #tpu.memory_space<vmem>>, vector<1x1x16x4xf32>,
    %20 = vector.extract_strided_slice %7 {offsets = [0, 12], sizes = [16, 4], strides = [1, 1]} : vector<16x16xf32> to vector<16x4xf32>
    %c0_16 = arith.constant 0 : index
    %c3 = arith.constant 3 : index
    %c0_17 = arith.constant 0 : index
    %c0_18 = arith.constant 0 : index
    %21 = vector.load %arg5[%c0_16, %c3, %c0_17, %c0_18] : memref<16x4x16x4xf32, #tpu.memory_space<vmem>>, vector<1x1x16x4xf32>
    %22 = vector.shape_cast %21 : vector<1x1x16x4xf32> to vector<16x4xf32>
    %23 = vector.shape_cast %20 : vector<16x4xf32> to vector<1x1x16x4xf32>
    tpu.vector_store %arg5[%c0_16, %c3, %c0_17, %c0_18], %23 {strides = array<i32>} : memref<16x4x16x4xf32, #tpu.memory_space<vmem>>, vector<1x1x16x4xf32>,
    %24 = vector.extract_strided_slice %6 {offsets = [16, 0], sizes = [16, 16], strides = [1, 1]} : vector<256x16xf32> to vector<16x16xf32>
    %25 = vector.extract_strided_slice %24 {offsets = [0, 0], sizes = [16, 4], strides = [1, 1]} : vector<16x16xf32> to vector<16x4xf32>
    %c1_19 = arith.constant 1 : index
    %c0_20 = arith.constant 0 : index
    %c0_21 = arith.constant 0 : index
    %c0_22 = arith.constant 0 : index
    %26 = vector.load %arg5[%c1_19, %c0_20, %c0_21, %c0_22] : memref<16x4x16x4xf32, #tpu.memory_space<vmem>>, vector<1x1x16x4xf32>
    %27 = vector.shape_cast %26 : vector<1x1x16x4xf32> to vector<16x4xf32>
    %28 = vector.shape_cast %25 : vector<16x4xf32> to vector<1x1x16x4xf32>
    tpu.vector_store %arg5[%c1_19, %c0_20, %c0_21, %c0_22], %28 {strides = array<i32>} : memref<16x4x16x4xf32, #tpu.memory_space<vmem>>, vector<1x1x16x4xf32>,
    %29 = vector.extract_strided_slice %24 {offsets = [0, 4], sizes = [16, 4], strides = [1, 1]} : vector<16x16xf32> to vector<16x4xf32>
    %c1_23 = arith.constant 1 : index
    %c1_24 = arith.constant 1 : index
    %c0_25 = arith.constant 0 : index
    %c0_26 = arith.constant 0 : index
    %30 = vector.load %arg5[%c1_23, %c1_24, %c0_25, %c0_26] : memref<16x4x16x4xf32, #tpu.memory_space<vmem>>, vector<1x1x16x4xf32>
    %31 = vector.shape_cast %30 : vector<1x1x16x4xf32> to vector<16x4xf32>
    %32 = vector.shape_cast %29 : vector<16x4xf32> to vector<1x1x16x4xf32>
    tpu.vector_store %arg5[%c1_23, %c1_24, %c0_25, %c0_26], %32 {strides = array<i32>} : memref<16x4x16x4xf32, #tpu.memory_space<vmem>>, vector<1x1x16x4xf32>,
    %33 = vector.extract_strided_slice %24 {offsets = [0, 8], sizes = [16, 4], strides = [1, 1]} : vector<16x16xf32> to vector<16x4xf32>
    %c1_27 = arith.constant 1 : index
    %c2_28 = arith.constant 2 : index
    %c0_29 = arith.constant 0 : index
    %c0_30 = arith.constant 0 : index
    %34 = vector.load %arg5[%c1_27, %c2_28, %c0_29, %c0_30] : memref<16x4x16x4xf32, #tpu.memory_space<vmem>>, vector<1x1x16x4xf32>
    %35 = vector.shape_cast %34 : vector<1x1x16x4xf32> to vector<16x4xf32>
    %36 = vector.shape_cast %33 : vector<16x4xf32> to vector<1x1x16x4xf32>
    tpu.vector_store %arg5[%c1_27, %c2_28, %c0_29, %c0_30], %36 {strides = array<i32>} : memref<16x4x16x4xf32, #tpu.memory_space<vmem>>, vector<1x1x16x4xf32>,
    %37 = vector.extract_strided_slice %24 {offsets = [0, 12], sizes = [16, 4], strides = [1, 1]} : vector<16x16xf32> to vector<16x4xf32>
    %c1_31 = arith.constant 1 : index
    %c3_32 = arith.constant 3 : index
    %c0_33 = arith.constant 0 : index
    %c0_34 = arith.constant 0 : index
    %38 = vector.load %arg5[%c1_31, %c3_32, %c0_33, %c0_34] : memref<16x4x16x4xf32, #tpu.memory_space<vmem>>, vector<1x1x16x4xf32>
    %39 = vector.shape_cast %38 : vector<1x1x16x4xf32> to vector<16x4xf32>
    %40 = vector.shape_cast %37 : vector<16x4xf32> to vector<1x1x16x4xf32>
    tpu.vector_store %arg5[%c1_31, %c3_32, %c0_33, %c0_34], %40 {strides = array<i32>} : memref<16x4x16x4xf32, #tpu.memory_space<vmem>>, vector<1x1x16x4xf32>,
    %41 = vector.extract_strided_slice %6 {offsets = [32, 0], sizes = [16, 16], strides = [1, 1]} : vector<256x16xf32> to vector<16x16xf32>
    %42 = vector.extract_strided_slice %41 {offsets = [0, 0], sizes = [16, 4], strides = [1, 1]} : vector<16x16xf32> to vector<16x4xf32>
    %c2_35 = arith.constant 2 : index
    %c0_36 = arith.constant 0 : index
    %c0_37 = arith.constant 0 : index
    %c0_38 = arith.constant 0 : index
    %43 = vector.load %arg5[%c2_35, %c0_36, %c0_37, %c0_38] : memref<16x4x16x4xf32, #tpu.memory_space<vmem>>, vector<1x1x16x4xf32>
    %44 = vector.shape_cast %43 : vector<1x1x16x4xf32> to vector<16x4xf32>
    %45 = vector.shape_cast %42 : vector<16x4xf32> to vector<1x1x16x4xf32>
    tpu.vector_store %arg5[%c2_35, %c0_36, %c0_37, %c0_38], %45 {strides = array<i32>} : memref<16x4x16x4xf32, #tpu.memory_space<vmem>>, vector<1x1x16x4xf32>,
    %46 = vector.extract_strided_slice %41 {offsets = [0, 4], sizes = [16, 4], strides = [1, 1]} : vector<16x16xf32> to vector<16x4xf32>
    %c2_39 = arith.constant 2 : index
    %c1_40 = arith.constant 1 : index
    %c0_41 = arith.constant 0 : index
    %c0_42 = arith.constant 0 : index
    %47 = vector.load %arg5[%c2_39, %c1_40, %c0_41, %c0_42] : memref<16x4x16x4xf32, #tpu.memory_space<vmem>>, vector<1x1x16x4xf32>
    %48 = vector.shape_cast %47 : vector<1x1x16x4xf32> to vector<16x4xf32>
    %49 = vector.shape_cast %46 : vector<16x4xf32> to vector<1x1x16x4xf32>
    tpu.vector_store %arg5[%c2_39, %c1_40, %c0_41, %c0_42], %49 {strides = array<i32>} : memref<16x4x16x4xf32, #tpu.memory_space<vmem>>, vector<1x1x16x4xf32>,
    %50 = vector.extract_strided_slice %41 {offsets = [0, 8], sizes = [16, 4], strides = [1, 1]} : vector<16x16xf32> to vector<16x4xf32>
    %c2_43 = arith.constant 2 : index
    %c2_44 = arith.constant 2 : index
    %c0_45 = arith.constant 0 : index
    %c0_46 = arith.constant 0 : index
    %51 = vector.load %arg5[%c2_43, %c2_44, %c0_45, %c0_46] : memref<16x4x16x4xf32, #tpu.memory_space<vmem>>, vector<1x1x16x4xf32>
    %52 = vector.shape_cast %51 : vector<1x1x16x4xf32> to vector<16x4xf32>
    %53 = vector.shape_cast %50 : vector<16x4xf32> to vector<1x1x16x4xf32>
    tpu.vector_store %arg5[%c2_43, %c2_44, %c0_45, %c0_46], %53 {strides = array<i32>} : memref<16x4x16x4xf32, #tpu.memory_space<vmem>>, vector<1x1x16x4xf32>,
    %54 = vector.extract_strided_slice %41 {offsets = [0, 12], sizes = [16, 4], strides = [1, 1]} : vector<16x16xf32> to vector<16x4xf32>
    %c2_47 = arith.constant 2 : index
    %c3_48 = arith.constant 3 : index
    %c0_49 = arith.constant 0 : index
    %c0_50 = arith.constant 0 : index
    %55 = vector.load %arg5[%c2_47, %c3_48, %c0_49, %c0_50] : memref<16x4x16x4xf32, #tpu.memory_space<vmem>>, vector<1x1x16x4xf32>
    %56 = vector.shape_cast %55 : vector<1x1x16x4xf32> to vector<16x4xf32>
    %57 = vector.shape_cast %54 : vector<16x4xf32> to vector<1x1x16x4xf32>
    tpu.vector_store %arg5[%c2_47, %c3_48, %c0_49, %c0_50], %57 {strides = array<i32>} : memref<16x4x16x4xf32, #tpu.memory_space<vmem>>, vector<1x1x16x4xf32>,
    %58 = vector.extract_strided_slice %6 {offsets = [48, 0], sizes = [16, 16], strides = [1, 1]} : vector<256x16xf32> to vector<16x16xf32>
    %59 = vector.extract_strided_slice %58 {offsets = [0, 0], sizes = [16, 4], strides = [1, 1]} : vector<16x16xf32> to vector<16x4xf32>
    %c3_51 = arith.constant 3 : index
    %c0_52 = arith.constant 0 : index
    %c0_53 = arith.constant 0 : index
    %c0_54 = arith.constant 0 : index
    %60 = vector.load %arg5[%c3_51, %c0_52, %c0_53, %c0_54] : memref<16x4x16x4xf32, #tpu.memory_space<vmem>>, vector<1x1x16x4xf32>
    %61 = vector.shape_cast %60 : vector<1x1x16x4xf32> to vector<16x4xf32>
    %62 = vector.shape_cast %59 : vector<16x4xf32> to vector<1x1x16x4xf32>
    tpu.vector_store %arg5[%c3_51, %c0_52, %c0_53, %c0_54], %62 {strides = array<i32>} : memref<16x4x16x4xf32, #tpu.memory_space<vmem>>, vector<1x1x16x4xf32>,
    %63 = vector.extract_strided_slice %58 {offsets = [0, 4], sizes = [16, 4], strides = [1, 1]} : vector<16x16xf32> to vector<16x4xf32>
    %c3_55 = arith.constant 3 : index
    %c1_56 = arith.constant 1 : index
    %c0_57 = arith.constant 0 : index
    %c0_58 = arith.constant 0 : index
    %64 = vector.load %arg5[%c3_55, %c1_56, %c0_57, %c0_58] : memref<16x4x16x4xf32, #tpu.memory_space<vmem>>, vector<1x1x16x4xf32>
    %65 = vector.shape_cast %64 : vector<1x1x16x4xf32> to vector<16x4xf32>
    %66 = vector.shape_cast %63 : vector<16x4xf32> to vector<1x1x16x4xf32>
    tpu.vector_store %arg5[%c3_55, %c1_56, %c0_57, %c0_58], %66 {strides = array<i32>} : memref<16x4x16x4xf32, #tpu.memory_space<vmem>>, vector<1x1x16x4xf32>,
    %67 = vector.extract_strided_slice %58 {offsets = [0, 8], sizes = [16, 4], strides = [1, 1]} : vector<16x16xf32> to vector<16x4xf32>
    %c3_59 = arith.constant 3 : index
    %c2_60 = arith.constant 2 : index
    %c0_61 = arith.constant 0 : index
    %c0_62 = arith.constant 0 : index
    %68 = vector.load %arg5[%c3_59, %c2_60, %c0_61, %c0_62] : memref<16x4x16x4xf32, #tpu.memory_space<vmem>>, vector<1x1x16x4xf32>
    %69 = vector.shape_cast %68 : vector<1x1x16x4xf32> to vector<16x4xf32>
    %70 = vector.shape_cast %67 : vector<16x4xf32> to vector<1x1x16x4xf32>
    tpu.vector_store %arg5[%c3_59, %c2_60, %c0_61, %c0_62], %70 {strides = array<i32>} : memref<16x4x16x4xf32, #tpu.memory_space<vmem>>, vector<1x1x16x4xf32>,
    %71 = vector.extract_strided_slice %58 {offsets = [0, 12], sizes = [16, 4], strides = [1, 1]} : vector<16x16xf32> to vector<16x4xf32>
    %c3_63 = arith.constant 3 : index
    %c3_64 = arith.constant 3 : index
    %c0_65 = arith.constant 0 : index
    %c0_66 = arith.constant 0 : index
    %72 = vector.load %arg5[%c3_63, %c3_64, %c0_65, %c0_66] : memref<16x4x16x4xf32, #tpu.memory_space<vmem>>, vector<1x1x16x4xf32>
    %73 = vector.shape_cast %72 : vector<1x1x16x4xf32> to vector<16x4xf32>
    %74 = vector.shape_cast %71 : vector<16x4xf32> to vector<1x1x16x4xf32>
    tpu.vector_store %arg5[%c3_63, %c3_64, %c0_65, %c0_66], %74 {strides = array<i32>} : memref<16x4x16x4xf32, #tpu.memory_space<vmem>>, vector<1x1x16x4xf32>,
    %75 = vector.extract_strided_slice %6 {offsets = [64, 0], sizes = [16, 16], strides = [1, 1]} : vector<256x16xf32> to vector<16x16xf32>
    %76 = vector.extract_strided_slice %75 {offsets = [0, 0], sizes = [16, 4], strides = [1, 1]} : vector<16x16xf32> to vector<16x4xf32>
    %c4 = arith.constant 4 : index
    %c0_67 = arith.constant 0 : index
    %c0_68 = arith.constant 0 : index
    %c0_69 = arith.constant 0 : index
    %77 = vector.load %arg5[%c4, %c0_67, %c0_68, %c0_69] : memref<16x4x16x4xf32, #tpu.memory_space<vmem>>, vector<1x1x16x4xf32>
    %78 = vector.shape_cast %77 : vector<1x1x16x4xf32> to vector<16x4xf32>
    %79 = vector.shape_cast %76 : vector<16x4xf32> to vector<1x1x16x4xf32>
    tpu.vector_store %arg5[%c4, %c0_67, %c0_68, %c0_69], %79 {strides = array<i32>} : memref<16x4x16x4xf32, #tpu.memory_space<vmem>>, vector<1x1x16x4xf32>,
    %80 = vector.extract_strided_slice %75 {offsets = [0, 4], sizes = [16, 4], strides = [1, 1]} : vector<16x16xf32> to vector<16x4xf32>
    %c4_70 = arith.constant 4 : index
    %c1_71 = arith.constant 1 : index
    %c0_72 = arith.constant 0 : index
    %c0_73 = arith.constant 0 : index
    %81 = vector.load %arg5[%c4_70, %c1_71, %c0_72, %c0_73] : memref<16x4x16x4xf32, #tpu.memory_space<vmem>>, vector<1x1x16x4xf32>
    %82 = vector.shape_cast %81 : vector<1x1x16x4xf32> to vector<16x4xf32>
    %83 = vector.shape_cast %80 : vector<16x4xf32> to vector<1x1x16x4xf32>
    tpu.vector_store %arg5[%c4_70, %c1_71, %c0_72, %c0_73], %83 {strides = array<i32>} : memref<16x4x16x4xf32, #tpu.memory_space<vmem>>, vector<1x1x16x4xf32>,
    %84 = vector.extract_strided_slice %75 {offsets = [0, 8], sizes = [16, 4], strides = [1, 1]} : vector<16x16xf32> to vector<16x4xf32>
    %c4_74 = arith.constant 4 : index
    %c2_75 = arith.constant 2 : index
    %c0_76 = arith.constant 0 : index
    %c0_77 = arith.constant 0 : index
    %85 = vector.load %arg5[%c4_74, %c2_75, %c0_76, %c0_77] : memref<16x4x16x4xf32, #tpu.memory_space<vmem>>, vector<1x1x16x4xf32>
    %86 = vector.shape_cast %85 : vector<1x1x16x4xf32> to vector<16x4xf32>
    %87 = vector.shape_cast %84 : vector<16x4xf32> to vector<1x1x16x4xf32>
    tpu.vector_store %arg5[%c4_74, %c2_75, %c0_76, %c0_77], %87 {strides = array<i32>} : memref<16x4x16x4xf32, #tpu.memory_space<vmem>>, vector<1x1x16x4xf32>,
    %88 = vector.extract_strided_slice %75 {offsets = [0, 12], sizes = [16, 4], strides = [1, 1]} : vector<16x16xf32> to vector<16x4xf32>
    %c4_78 = arith.constant 4 : index
    %c3_79 = arith.constant 3 : index
    %c0_80 = arith.constant 0 : index
    %c0_81 = arith.constant 0 : index
    %89 = vector.load %arg5[%c4_78, %c3_79, %c0_80, %c0_81] : memref<16x4x16x4xf32, #tpu.memory_space<vmem>>, vector<1x1x16x4xf32>
    %90 = vector.shape_cast %89 : vector<1x1x16x4xf32> to vector<16x4xf32>
    %91 = vector.shape_cast %88 : vector<16x4xf32> to vector<1x1x16x4xf32>
    tpu.vector_store %arg5[%c4_78, %c3_79, %c0_80, %c0_81], %91 {strides = array<i32>} : memref<16x4x16x4xf32, #tpu.memory_space<vmem>>, vector<1x1x16x4xf32>,
    %92 = vector.extract_strided_slice %6 {offsets = [80, 0], sizes = [16, 16], strides = [1, 1]} : vector<256x16xf32> to vector<16x16xf32>
    %93 = vector.extract_strided_slice %92 {offsets = [0, 0], sizes = [16, 4], strides = [1, 1]} : vector<16x16xf32> to vector<16x4xf32>
    %c5 = arith.constant 5 : index
    %c0_82 = arith.constant 0 : index
    %c0_83 = arith.constant 0 : index
    %c0_84 = arith.constant 0 : index
    %94 = vector.load %arg5[%c5, %c0_82, %c0_83, %c0_84] : memref<16x4x16x4xf32, #tpu.memory_space<vmem>>, vector<1x1x16x4xf32>
    %95 = vector.shape_cast %94 : vector<1x1x16x4xf32> to vector<16x4xf32>
    %96 = vector.shape_cast %93 : vector<16x4xf32> to vector<1x1x16x4xf32>
    tpu.vector_store %arg5[%c5, %c0_82, %c0_83, %c0_84], %96 {strides = array<i32>} : memref<16x4x16x4xf32, #tpu.memory_space<vmem>>, vector<1x1x16x4xf32>,
    %97 = vector.extract_strided_slice %92 {offsets = [0, 4], sizes = [16, 4], strides = [1, 1]} : vector<16x16xf32> to vector<16x4xf32>
    %c5_85 = arith.constant 5 : index
    %c1_86 = arith.constant 1 : index
    %c0_87 = arith.constant 0 : index
    %c0_88 = arith.constant 0 : index
    %98 = vector.load %arg5[%c5_85, %c1_86, %c0_87, %c0_88] : memref<16x4x16x4xf32, #tpu.memory_space<vmem>>, vector<1x1x16x4xf32>
    %99 = vector.shape_cast %98 : vector<1x1x16x4xf32> to vector<16x4xf32>
    %100 = vector.shape_cast %97 : vector<16x4xf32> to vector<1x1x16x4xf32>
    tpu.vector_store %arg5[%c5_85, %c1_86, %c0_87, %c0_88], %100 {strides = array<i32>} : memref<16x4x16x4xf32, #tpu.memory_space<vmem>>, vector<1x1x16x4xf32>,
    %101 = vector.extract_strided_slice %92 {offsets = [0, 8], sizes = [16, 4], strides = [1, 1]} : vector<16x16xf32> to vector<16x4xf32>
    %c5_89 = arith.constant 5 : index
    %c2_90 = arith.constant 2 : index
    %c0_91 = arith.constant 0 : index
    %c0_92 = arith.constant 0 : index
    %102 = vector.load %arg5[%c5_89, %c2_90, %c0_91, %c0_92] : memref<16x4x16x4xf32, #tpu.memory_space<vmem>>, vector<1x1x16x4xf32>
    %103 = vector.shape_cast %102 : vector<1x1x16x4xf32> to vector<16x4xf32>
    %104 = vector.shape_cast %101 : vector<16x4xf32> to vector<1x1x16x4xf32>
    tpu.vector_store %arg5[%c5_89, %c2_90, %c0_91, %c0_92], %104 {strides = array<i32>} : memref<16x4x16x4xf32, #tpu.memory_space<vmem>>, vector<1x1x16x4xf32>,
    %105 = vector.extract_strided_slice %92 {offsets = [0, 12], sizes = [16, 4], strides = [1, 1]} : vector<16x16xf32> to vector<16x4xf32>
    %c5_93 = arith.constant 5 : index
    %c3_94 = arith.constant 3 : index
    %c0_95 = arith.constant 0 : index
    %c0_96 = arith.constant 0 : index
    %106 = vector.load %arg5[%c5_93, %c3_94, %c0_95, %c0_96] : memref<16x4x16x4xf32, #tpu.memory_space<vmem>>, vector<1x1x16x4xf32>
    %107 = vector.shape_cast %106 : vector<1x1x16x4xf32> to vector<16x4xf32>
    %108 = vector.shape_cast %105 : vector<16x4xf32> to vector<1x1x16x4xf32>
    tpu.vector_store %arg5[%c5_93, %c3_94, %c0_95, %c0_96], %108 {strides = array<i32>} : memref<16x4x16x4xf32, #tpu.memory_space<vmem>>, vector<1x1x16x4xf32>,
    %109 = vector.extract_strided_slice %6 {offsets = [96, 0], sizes = [16, 16], strides = [1, 1]} : vector<256x16xf32> to vector<16x16xf32>
    %110 = vector.extract_strided_slice %109 {offsets = [0, 0], sizes = [16, 4], strides = [1, 1]} : vector<16x16xf32> to vector<16x4xf32>
    %c6 = arith.constant 6 : index
    %c0_97 = arith.constant 0 : index
    %c0_98 = arith.constant 0 : index
    %c0_99 = arith.constant 0 : index
    %111 = vector.load %arg5[%c6, %c0_97, %c0_98, %c0_99] : memref<16x4x16x4xf32, #tpu.memory_space<vmem>>, vector<1x1x16x4xf32>
    %112 = vector.shape_cast %111 : vector<1x1x16x4xf32> to vector<16x4xf32>
    %113 = vector.shape_cast %110 : vector<16x4xf32> to vector<1x1x16x4xf32>
    tpu.vector_store %arg5[%c6, %c0_97, %c0_98, %c0_99], %113 {strides = array<i32>} : memref<16x4x16x4xf32, #tpu.memory_space<vmem>>, vector<1x1x16x4xf32>,
    %114 = vector.extract_strided_slice %109 {offsets = [0, 4], sizes = [16, 4], strides = [1, 1]} : vector<16x16xf32> to vector<16x4xf32>
    %c6_100 = arith.constant 6 : index
    %c1_101 = arith.constant 1 : index
    %c0_102 = arith.constant 0 : index
    %c0_103 = arith.constant 0 : index
    %115 = vector.load %arg5[%c6_100, %c1_101, %c0_102, %c0_103] : memref<16x4x16x4xf32, #tpu.memory_space<vmem>>, vector<1x1x16x4xf32>
    %116 = vector.shape_cast %115 : vector<1x1x16x4xf32> to vector<16x4xf32>
    %117 = vector.shape_cast %114 : vector<16x4xf32> to vector<1x1x16x4xf32>
    tpu.vector_store %arg5[%c6_100, %c1_101, %c0_102, %c0_103], %117 {strides = array<i32>} : memref<16x4x16x4xf32, #tpu.memory_space<vmem>>, vector<1x1x16x4xf32>,
    %118 = vector.extract_strided_slice %109 {offsets = [0, 8], sizes = [16, 4], strides = [1, 1]} : vector<16x16xf32> to vector<16x4xf32>
    %c6_104 = arith.constant 6 : index
    %c2_105 = arith.constant 2 : index
    %c0_106 = arith.constant 0 : index
    %c0_107 = arith.constant 0 : index
    %119 = vector.load %arg5[%c6_104, %c2_105, %c0_106, %c0_107] : memref<16x4x16x4xf32, #tpu.memory_space<vmem>>, vector<1x1x16x4xf32>
    %120 = vector.shape_cast %119 : vector<1x1x16x4xf32> to vector<16x4xf32>
    %121 = vector.shape_cast %118 : vector<16x4xf32> to vector<1x1x16x4xf32>
    tpu.vector_store %arg5[%c6_104, %c2_105, %c0_106, %c0_107], %121 {strides = array<i32>} : memref<16x4x16x4xf32, #tpu.memory_space<vmem>>, vector<1x1x16x4xf32>,
    %122 = vector.extract_strided_slice %109 {offsets = [0, 12], sizes = [16, 4], strides = [1, 1]} : vector<16x16xf32> to vector<16x4xf32>
    %c6_108 = arith.constant 6 : index
    %c3_109 = arith.constant 3 : index
    %c0_110 = arith.constant 0 : index
    %c0_111 = arith.constant 0 : index
    %123 = vector.load %arg5[%c6_108, %c3_109, %c0_110, %c0_111] : memref<16x4x16x4xf32, #tpu.memory_space<vmem>>, vector<1x1x16x4xf32>
    %124 = vector.shape_cast %123 : vector<1x1x16x4xf32> to vector<16x4xf32>
    %125 = vector.shape_cast %122 : vector<16x4xf32> to vector<1x1x16x4xf32>
    tpu.vector_store %arg5[%c6_108, %c3_109, %c0_110, %c0_111], %125 {strides = array<i32>} : memref<16x4x16x4xf32, #tpu.memory_space<vmem>>, vector<1x1x16x4xf32>,
    %126 = vector.extract_strided_slice %6 {offsets = [112, 0], sizes = [16, 16], strides = [1, 1]} : vector<256x16xf32> to vector<16x16xf32>
    %127 = vector.extract_strided_slice %126 {offsets = [0, 0], sizes = [16, 4], strides = [1, 1]} : vector<16x16xf32> to vector<16x4xf32>
    %c7 = arith.constant 7 : index
    %c0_112 = arith.constant 0 : index
    %c0_113 = arith.constant 0 : index
    %c0_114 = arith.constant 0 : index
    %128 = vector.load %arg5[%c7, %c0_112, %c0_113, %c0_114] : memref<16x4x16x4xf32, #tpu.memory_space<vmem>>, vector<1x1x16x4xf32>
    %129 = vector.shape_cast %128 : vector<1x1x16x4xf32> to vector<16x4xf32>
    %130 = vector.shape_cast %127 : vector<16x4xf32> to vector<1x1x16x4xf32>
    tpu.vector_store %arg5[%c7, %c0_112, %c0_113, %c0_114], %130 {strides = array<i32>} : memref<16x4x16x4xf32, #tpu.memory_space<vmem>>, vector<1x1x16x4xf32>,
    %131 = vector.extract_strided_slice %126 {offsets = [0, 4], sizes = [16, 4], strides = [1, 1]} : vector<16x16xf32> to vector<16x4xf32>
    %c7_115 = arith.constant 7 : index
    %c1_116 = arith.constant 1 : index
    %c0_117 = arith.constant 0 : index
    %c0_118 = arith.constant 0 : index
    %132 = vector.load %arg5[%c7_115, %c1_116, %c0_117, %c0_118] : memref<16x4x16x4xf32, #tpu.memory_space<vmem>>, vector<1x1x16x4xf32>
    %133 = vector.shape_cast %132 : vector<1x1x16x4xf32> to vector<16x4xf32>
    %134 = vector.shape_cast %131 : vector<16x4xf32> to vector<1x1x16x4xf32>
    tpu.vector_store %arg5[%c7_115, %c1_116, %c0_117, %c0_118], %134 {strides = array<i32>} : memref<16x4x16x4xf32, #tpu.memory_space<vmem>>, vector<1x1x16x4xf32>,
    %135 = vector.extract_strided_slice %126 {offsets = [0, 8], sizes = [16, 4], strides = [1, 1]} : vector<16x16xf32> to vector<16x4xf32>
    %c7_119 = arith.constant 7 : index
    %c2_120 = arith.constant 2 : index
    %c0_121 = arith.constant 0 : index
    %c0_122 = arith.constant 0 : index
    %136 = vector.load %arg5[%c7_119, %c2_120, %c0_121, %c0_122] : memref<16x4x16x4xf32, #tpu.memory_space<vmem>>, vector<1x1x16x4xf32>
    %137 = vector.shape_cast %136 : vector<1x1x16x4xf32> to vector<16x4xf32>
    %138 = vector.shape_cast %135 : vector<16x4xf32> to vector<1x1x16x4xf32>
    tpu.vector_store %arg5[%c7_119, %c2_120, %c0_121, %c0_122], %138 {strides = array<i32>} : memref<16x4x16x4xf32, #tpu.memory_space<vmem>>, vector<1x1x16x4xf32>,
    %139 = vector.extract_strided_slice %126 {offsets = [0, 12], sizes = [16, 4], strides = [1, 1]} : vector<16x16xf32> to vector<16x4xf32>
    %c7_123 = arith.constant 7 : index
    %c3_124 = arith.constant 3 : index
    %c0_125 = arith.constant 0 : index
    %c0_126 = arith.constant 0 : index
    %140 = vector.load %arg5[%c7_123, %c3_124, %c0_125, %c0_126] : memref<16x4x16x4xf32, #tpu.memory_space<vmem>>, vector<1x1x16x4xf32>
    %141 = vector.shape_cast %140 : vector<1x1x16x4xf32> to vector<16x4xf32>
    %142 = vector.shape_cast %139 : vector<16x4xf32> to vector<1x1x16x4xf32>
    tpu.vector_store %arg5[%c7_123, %c3_124, %c0_125, %c0_126], %142 {strides = array<i32>} : memref<16x4x16x4xf32, #tpu.memory_space<vmem>>, vector<1x1x16x4xf32>,
    %143 = vector.extract_strided_slice %6 {offsets = [128, 0], sizes = [16, 16], strides = [1, 1]} : vector<256x16xf32> to vector<16x16xf32>
    %144 = vector.extract_strided_slice %143 {offsets = [0, 0], sizes = [16, 4], strides = [1, 1]} : vector<16x16xf32> to vector<16x4xf32>
    %c8 = arith.constant 8 : index
    %c0_127 = arith.constant 0 : index
    %c0_128 = arith.constant 0 : index
    %c0_129 = arith.constant 0 : index
    %145 = vector.load %arg5[%c8, %c0_127, %c0_128, %c0_129] : memref<16x4x16x4xf32, #tpu.memory_space<vmem>>, vector<1x1x16x4xf32>
    %146 = vector.shape_cast %145 : vector<1x1x16x4xf32> to vector<16x4xf32>
    %147 = vector.shape_cast %144 : vector<16x4xf32> to vector<1x1x16x4xf32>
    tpu.vector_store %arg5[%c8, %c0_127, %c0_128, %c0_129], %147 {strides = array<i32>} : memref<16x4x16x4xf32, #tpu.memory_space<vmem>>, vector<1x1x16x4xf32>,
    %148 = vector.extract_strided_slice %143 {offsets = [0, 4], sizes = [16, 4], strides = [1, 1]} : vector<16x16xf32> to vector<16x4xf32>
    %c8_130 = arith.constant 8 : index
    %c1_131 = arith.constant 1 : index
    %c0_132 = arith.constant 0 : index
    %c0_133 = arith.constant 0 : index
    %149 = vector.load %arg5[%c8_130, %c1_131, %c0_132, %c0_133] : memref<16x4x16x4xf32, #tpu.memory_space<vmem>>, vector<1x1x16x4xf32>
    %150 = vector.shape_cast %149 : vector<1x1x16x4xf32> to vector<16x4xf32>
    %151 = vector.shape_cast %148 : vector<16x4xf32> to vector<1x1x16x4xf32>
    tpu.vector_store %arg5[%c8_130, %c1_131, %c0_132, %c0_133], %151 {strides = array<i32>} : memref<16x4x16x4xf32, #tpu.memory_space<vmem>>, vector<1x1x16x4xf32>,
    %152 = vector.extract_strided_slice %143 {offsets = [0, 8], sizes = [16, 4], strides = [1, 1]} : vector<16x16xf32> to vector<16x4xf32>
    %c8_134 = arith.constant 8 : index
    %c2_135 = arith.constant 2 : index
    %c0_136 = arith.constant 0 : index
    %c0_137 = arith.constant 0 : index
    %153 = vector.load %arg5[%c8_134, %c2_135, %c0_136, %c0_137] : memref<16x4x16x4xf32, #tpu.memory_space<vmem>>, vector<1x1x16x4xf32>
    %154 = vector.shape_cast %153 : vector<1x1x16x4xf32> to vector<16x4xf32>
    %155 = vector.shape_cast %152 : vector<16x4xf32> to vector<1x1x16x4xf32>
    tpu.vector_store %arg5[%c8_134, %c2_135, %c0_136, %c0_137], %155 {strides = array<i32>} : memref<16x4x16x4xf32, #tpu.memory_space<vmem>>, vector<1x1x16x4xf32>,
    %156 = vector.extract_strided_slice %143 {offsets = [0, 12], sizes = [16, 4], strides = [1, 1]} : vector<16x16xf32> to vector<16x4xf32>
    %c8_138 = arith.constant 8 : index
    %c3_139 = arith.constant 3 : index
    %c0_140 = arith.constant 0 : index
    %c0_141 = arith.constant 0 : index
    %157 = vector.load %arg5[%c8_138, %c3_139, %c0_140, %c0_141] : memref<16x4x16x4xf32, #tpu.memory_space<vmem>>, vector<1x1x16x4xf32>
    %158 = vector.shape_cast %157 : vector<1x1x16x4xf32> to vector<16x4xf32>
    %159 = vector.shape_cast %156 : vector<16x4xf32> to vector<1x1x16x4xf32>
    tpu.vector_store %arg5[%c8_138, %c3_139, %c0_140, %c0_141], %159 {strides = array<i32>} : memref<16x4x16x4xf32, #tpu.memory_space<vmem>>, vector<1x1x16x4xf32>,
    %160 = vector.extract_strided_slice %6 {offsets = [144, 0], sizes = [16, 16], strides = [1, 1]} : vector<256x16xf32> to vector<16x16xf32>
    %161 = vector.extract_strided_slice %160 {offsets = [0, 0], sizes = [16, 4], strides = [1, 1]} : vector<16x16xf32> to vector<16x4xf32>
    %c9 = arith.constant 9 : index
    %c0_142 = arith.constant 0 : index
    %c0_143 = arith.constant 0 : index
    %c0_144 = arith.constant 0 : index
    %162 = vector.load %arg5[%c9, %c0_142, %c0_143, %c0_144] : memref<16x4x16x4xf32, #tpu.memory_space<vmem>>, vector<1x1x16x4xf32>
    %163 = vector.shape_cast %162 : vector<1x1x16x4xf32> to vector<16x4xf32>
    %164 = vector.shape_cast %161 : vector<16x4xf32> to vector<1x1x16x4xf32>
    tpu.vector_store %arg5[%c9, %c0_142, %c0_143, %c0_144], %164 {strides = array<i32>} : memref<16x4x16x4xf32, #tpu.memory_space<vmem>>, vector<1x1x16x4xf32>,
    %165 = vector.extract_strided_slice %160 {offsets = [0, 4], sizes = [16, 4], strides = [1, 1]} : vector<16x16xf32> to vector<16x4xf32>
    %c9_145 = arith.constant 9 : index
    %c1_146 = arith.constant 1 : index
    %c0_147 = arith.constant 0 : index
    %c0_148 = arith.constant 0 : index
    %166 = vector.load %arg5[%c9_145, %c1_146, %c0_147, %c0_148] : memref<16x4x16x4xf32, #tpu.memory_space<vmem>>, vector<1x1x16x4xf32>
    %167 = vector.shape_cast %166 : vector<1x1x16x4xf32> to vector<16x4xf32>
    %168 = vector.shape_cast %165 : vector<16x4xf32> to vector<1x1x16x4xf32>
    tpu.vector_store %arg5[%c9_145, %c1_146, %c0_147, %c0_148], %168 {strides = array<i32>} : memref<16x4x16x4xf32, #tpu.memory_space<vmem>>, vector<1x1x16x4xf32>,
    %169 = vector.extract_strided_slice %160 {offsets = [0, 8], sizes = [16, 4], strides = [1, 1]} : vector<16x16xf32> to vector<16x4xf32>
    %c9_149 = arith.constant 9 : index
    %c2_150 = arith.constant 2 : index
    %c0_151 = arith.constant 0 : index
    %c0_152 = arith.constant 0 : index
    %170 = vector.load %arg5[%c9_149, %c2_150, %c0_151, %c0_152] : memref<16x4x16x4xf32, #tpu.memory_space<vmem>>, vector<1x1x16x4xf32>
    %171 = vector.shape_cast %170 : vector<1x1x16x4xf32> to vector<16x4xf32>
    %172 = vector.shape_cast %169 : vector<16x4xf32> to vector<1x1x16x4xf32>
    tpu.vector_store %arg5[%c9_149, %c2_150, %c0_151, %c0_152], %172 {strides = array<i32>} : memref<16x4x16x4xf32, #tpu.memory_space<vmem>>, vector<1x1x16x4xf32>,
    %173 = vector.extract_strided_slice %160 {offsets = [0, 12], sizes = [16, 4], strides = [1, 1]} : vector<16x16xf32> to vector<16x4xf32>
    %c9_153 = arith.constant 9 : index
    %c3_154 = arith.constant 3 : index
    %c0_155 = arith.constant 0 : index
    %c0_156 = arith.constant 0 : index
    %174 = vector.load %arg5[%c9_153, %c3_154, %c0_155, %c0_156] : memref<16x4x16x4xf32, #tpu.memory_space<vmem>>, vector<1x1x16x4xf32>
    %175 = vector.shape_cast %174 : vector<1x1x16x4xf32> to vector<16x4xf32>
    %176 = vector.shape_cast %173 : vector<16x4xf32> to vector<1x1x16x4xf32>
    tpu.vector_store %arg5[%c9_153, %c3_154, %c0_155, %c0_156], %176 {strides = array<i32>} : memref<16x4x16x4xf32, #tpu.memory_space<vmem>>, vector<1x1x16x4xf32>,
    %177 = vector.extract_strided_slice %6 {offsets = [160, 0], sizes = [16, 16], strides = [1, 1]} : vector<256x16xf32> to vector<16x16xf32>
    %178 = vector.extract_strided_slice %177 {offsets = [0, 0], sizes = [16, 4], strides = [1, 1]} : vector<16x16xf32> to vector<16x4xf32>
    %c10 = arith.constant 10 : index
    %c0_157 = arith.constant 0 : index
    %c0_158 = arith.constant 0 : index
    %c0_159 = arith.constant 0 : index
    %179 = vector.load %arg5[%c10, %c0_157, %c0_158, %c0_159] : memref<16x4x16x4xf32, #tpu.memory_space<vmem>>, vector<1x1x16x4xf32>
    %180 = vector.shape_cast %179 : vector<1x1x16x4xf32> to vector<16x4xf32>
    %181 = vector.shape_cast %178 : vector<16x4xf32> to vector<1x1x16x4xf32>
    tpu.vector_store %arg5[%c10, %c0_157, %c0_158, %c0_159], %181 {strides = array<i32>} : memref<16x4x16x4xf32, #tpu.memory_space<vmem>>, vector<1x1x16x4xf32>,
    %182 = vector.extract_strided_slice %177 {offsets = [0, 4], sizes = [16, 4], strides = [1, 1]} : vector<16x16xf32> to vector<16x4xf32>
    %c10_160 = arith.constant 10 : index
    %c1_161 = arith.constant 1 : index
    %c0_162 = arith.constant 0 : index
    %c0_163 = arith.constant 0 : index
    %183 = vector.load %arg5[%c10_160, %c1_161, %c0_162, %c0_163] : memref<16x4x16x4xf32, #tpu.memory_space<vmem>>, vector<1x1x16x4xf32>
    %184 = vector.shape_cast %183 : vector<1x1x16x4xf32> to vector<16x4xf32>
    %185 = vector.shape_cast %182 : vector<16x4xf32> to vector<1x1x16x4xf32>
    tpu.vector_store %arg5[%c10_160, %c1_161, %c0_162, %c0_163], %185 {strides = array<i32>} : memref<16x4x16x4xf32, #tpu.memory_space<vmem>>, vector<1x1x16x4xf32>,
    %186 = vector.extract_strided_slice %177 {offsets = [0, 8], sizes = [16, 4], strides = [1, 1]} : vector<16x16xf32> to vector<16x4xf32>
    %c10_164 = arith.constant 10 : index
    %c2_165 = arith.constant 2 : index
    %c0_166 = arith.constant 0 : index
    %c0_167 = arith.constant 0 : index
    %187 = vector.load %arg5[%c10_164, %c2_165, %c0_166, %c0_167] : memref<16x4x16x4xf32, #tpu.memory_space<vmem>>, vector<1x1x16x4xf32>
    %188 = vector.shape_cast %187 : vector<1x1x16x4xf32> to vector<16x4xf32>
    %189 = vector.shape_cast %186 : vector<16x4xf32> to vector<1x1x16x4xf32>
    tpu.vector_store %arg5[%c10_164, %c2_165, %c0_166, %c0_167], %189 {strides = array<i32>} : memref<16x4x16x4xf32, #tpu.memory_space<vmem>>, vector<1x1x16x4xf32>,
    %190 = vector.extract_strided_slice %177 {offsets = [0, 12], sizes = [16, 4], strides = [1, 1]} : vector<16x16xf32> to vector<16x4xf32>
    %c10_168 = arith.constant 10 : index
    %c3_169 = arith.constant 3 : index
    %c0_170 = arith.constant 0 : index
    %c0_171 = arith.constant 0 : index
    %191 = vector.load %arg5[%c10_168, %c3_169, %c0_170, %c0_171] : memref<16x4x16x4xf32, #tpu.memory_space<vmem>>, vector<1x1x16x4xf32>
    %192 = vector.shape_cast %191 : vector<1x1x16x4xf32> to vector<16x4xf32>
    %193 = vector.shape_cast %190 : vector<16x4xf32> to vector<1x1x16x4xf32>
    tpu.vector_store %arg5[%c10_168, %c3_169, %c0_170, %c0_171], %193 {strides = array<i32>} : memref<16x4x16x4xf32, #tpu.memory_space<vmem>>, vector<1x1x16x4xf32>,
    %194 = vector.extract_strided_slice %6 {offsets = [176, 0], sizes = [16, 16], strides = [1, 1]} : vector<256x16xf32> to vector<16x16xf32>
    %195 = vector.extract_strided_slice %194 {offsets = [0, 0], sizes = [16, 4], strides = [1, 1]} : vector<16x16xf32> to vector<16x4xf32>
    %c11 = arith.constant 11 : index
    %c0_172 = arith.constant 0 : index
    %c0_173 = arith.constant 0 : index
    %c0_174 = arith.constant 0 : index
    %196 = vector.load %arg5[%c11, %c0_172, %c0_173, %c0_174] : memref<16x4x16x4xf32, #tpu.memory_space<vmem>>, vector<1x1x16x4xf32>
    %197 = vector.shape_cast %196 : vector<1x1x16x4xf32> to vector<16x4xf32>
    %198 = vector.shape_cast %195 : vector<16x4xf32> to vector<1x1x16x4xf32>
    tpu.vector_store %arg5[%c11, %c0_172, %c0_173, %c0_174], %198 {strides = array<i32>} : memref<16x4x16x4xf32, #tpu.memory_space<vmem>>, vector<1x1x16x4xf32>,
    %199 = vector.extract_strided_slice %194 {offsets = [0, 4], sizes = [16, 4], strides = [1, 1]} : vector<16x16xf32> to vector<16x4xf32>
    %c11_175 = arith.constant 11 : index
    %c1_176 = arith.constant 1 : index
    %c0_177 = arith.constant 0 : index
    %c0_178 = arith.constant 0 : index
    %200 = vector.load %arg5[%c11_175, %c1_176, %c0_177, %c0_178] : memref<16x4x16x4xf32, #tpu.memory_space<vmem>>, vector<1x1x16x4xf32>
    %201 = vector.shape_cast %200 : vector<1x1x16x4xf32> to vector<16x4xf32>
    %202 = vector.shape_cast %199 : vector<16x4xf32> to vector<1x1x16x4xf32>
    tpu.vector_store %arg5[%c11_175, %c1_176, %c0_177, %c0_178], %202 {strides = array<i32>} : memref<16x4x16x4xf32, #tpu.memory_space<vmem>>, vector<1x1x16x4xf32>,
    %203 = vector.extract_strided_slice %194 {offsets = [0, 8], sizes = [16, 4], strides = [1, 1]} : vector<16x16xf32> to vector<16x4xf32>
    %c11_179 = arith.constant 11 : index
    %c2_180 = arith.constant 2 : index
    %c0_181 = arith.constant 0 : index
    %c0_182 = arith.constant 0 : index
    %204 = vector.load %arg5[%c11_179, %c2_180, %c0_181, %c0_182] : memref<16x4x16x4xf32, #tpu.memory_space<vmem>>, vector<1x1x16x4xf32>
    %205 = vector.shape_cast %204 : vector<1x1x16x4xf32> to vector<16x4xf32>
    %206 = vector.shape_cast %203 : vector<16x4xf32> to vector<1x1x16x4xf32>
    tpu.vector_store %arg5[%c11_179, %c2_180, %c0_181, %c0_182], %206 {strides = array<i32>} : memref<16x4x16x4xf32, #tpu.memory_space<vmem>>, vector<1x1x16x4xf32>,
    %207 = vector.extract_strided_slice %194 {offsets = [0, 12], sizes = [16, 4], strides = [1, 1]} : vector<16x16xf32> to vector<16x4xf32>
    %c11_183 = arith.constant 11 : index
    %c3_184 = arith.constant 3 : index
    %c0_185 = arith.constant 0 : index
    %c0_186 = arith.constant 0 : index
    %208 = vector.load %arg5[%c11_183, %c3_184, %c0_185, %c0_186] : memref<16x4x16x4xf32, #tpu.memory_space<vmem>>, vector<1x1x16x4xf32>
    %209 = vector.shape_cast %208 : vector<1x1x16x4xf32> to vector<16x4xf32>
    %210 = vector.shape_cast %207 : vector<16x4xf32> to vector<1x1x16x4xf32>
    tpu.vector_store %arg5[%c11_183, %c3_184, %c0_185, %c0_186], %210 {strides = array<i32>} : memref<16x4x16x4xf32, #tpu.memory_space<vmem>>, vector<1x1x16x4xf32>,
    %211 = vector.extract_strided_slice %6 {offsets = [192, 0], sizes = [16, 16], strides = [1, 1]} : vector<256x16xf32> to vector<16x16xf32>
    %212 = vector.extract_strided_slice %211 {offsets = [0, 0], sizes = [16, 4], strides = [1, 1]} : vector<16x16xf32> to vector<16x4xf32>
    %c12 = arith.constant 12 : index
    %c0_187 = arith.constant 0 : index
    %c0_188 = arith.constant 0 : index
    %c0_189 = arith.constant 0 : index
    %213 = vector.load %arg5[%c12, %c0_187, %c0_188, %c0_189] : memref<16x4x16x4xf32, #tpu.memory_space<vmem>>, vector<1x1x16x4xf32>
    %214 = vector.shape_cast %213 : vector<1x1x16x4xf32> to vector<16x4xf32>
    %215 = vector.shape_cast %212 : vector<16x4xf32> to vector<1x1x16x4xf32>
    tpu.vector_store %arg5[%c12, %c0_187, %c0_188, %c0_189], %215 {strides = array<i32>} : memref<16x4x16x4xf32, #tpu.memory_space<vmem>>, vector<1x1x16x4xf32>,
    %216 = vector.extract_strided_slice %211 {offsets = [0, 4], sizes = [16, 4], strides = [1, 1]} : vector<16x16xf32> to vector<16x4xf32>
    %c12_190 = arith.constant 12 : index
    %c1_191 = arith.constant 1 : index
    %c0_192 = arith.constant 0 : index
    %c0_193 = arith.constant 0 : index
    %217 = vector.load %arg5[%c12_190, %c1_191, %c0_192, %c0_193] : memref<16x4x16x4xf32, #tpu.memory_space<vmem>>, vector<1x1x16x4xf32>
    %218 = vector.shape_cast %217 : vector<1x1x16x4xf32> to vector<16x4xf32>
    %219 = vector.shape_cast %216 : vector<16x4xf32> to vector<1x1x16x4xf32>
    tpu.vector_store %arg5[%c12_190, %c1_191, %c0_192, %c0_193], %219 {strides = array<i32>} : memref<16x4x16x4xf32, #tpu.memory_space<vmem>>, vector<1x1x16x4xf32>,
    %220 = vector.extract_strided_slice %211 {offsets = [0, 8], sizes = [16, 4], strides = [1, 1]} : vector<16x16xf32> to vector<16x4xf32>
    %c12_194 = arith.constant 12 : index
    %c2_195 = arith.constant 2 : index
    %c0_196 = arith.constant 0 : index
    %c0_197 = arith.constant 0 : index
    %221 = vector.load %arg5[%c12_194, %c2_195, %c0_196, %c0_197] : memref<16x4x16x4xf32, #tpu.memory_space<vmem>>, vector<1x1x16x4xf32>
    %222 = vector.shape_cast %221 : vector<1x1x16x4xf32> to vector<16x4xf32>
    %223 = vector.shape_cast %220 : vector<16x4xf32> to vector<1x1x16x4xf32>
    tpu.vector_store %arg5[%c12_194, %c2_195, %c0_196, %c0_197], %223 {strides = array<i32>} : memref<16x4x16x4xf32, #tpu.memory_space<vmem>>, vector<1x1x16x4xf32>,
    %224 = vector.extract_strided_slice %211 {offsets = [0, 12], sizes = [16, 4], strides = [1, 1]} : vector<16x16xf32> to vector<16x4xf32>
    %c12_198 = arith.constant 12 : index
    %c3_199 = arith.constant 3 : index
    %c0_200 = arith.constant 0 : index
    %c0_201 = arith.constant 0 : index
    %225 = vector.load %arg5[%c12_198, %c3_199, %c0_200, %c0_201] : memref<16x4x16x4xf32, #tpu.memory_space<vmem>>, vector<1x1x16x4xf32>
    %226 = vector.shape_cast %225 : vector<1x1x16x4xf32> to vector<16x4xf32>
    %227 = vector.shape_cast %224 : vector<16x4xf32> to vector<1x1x16x4xf32>
    tpu.vector_store %arg5[%c12_198, %c3_199, %c0_200, %c0_201], %227 {strides = array<i32>} : memref<16x4x16x4xf32, #tpu.memory_space<vmem>>, vector<1x1x16x4xf32>,
    %228 = vector.extract_strided_slice %6 {offsets = [208, 0], sizes = [16, 16], strides = [1, 1]} : vector<256x16xf32> to vector<16x16xf32>
    %229 = vector.extract_strided_slice %228 {offsets = [0, 0], sizes = [16, 4], strides = [1, 1]} : vector<16x16xf32> to vector<16x4xf32>
    %c13 = arith.constant 13 : index
    %c0_202 = arith.constant 0 : index
    %c0_203 = arith.constant 0 : index
    %c0_204 = arith.constant 0 : index
    %230 = vector.load %arg5[%c13, %c0_202, %c0_203, %c0_204] : memref<16x4x16x4xf32, #tpu.memory_space<vmem>>, vector<1x1x16x4xf32>
    %231 = vector.shape_cast %230 : vector<1x1x16x4xf32> to vector<16x4xf32>
    %232 = vector.shape_cast %229 : vector<16x4xf32> to vector<1x1x16x4xf32>
    tpu.vector_store %arg5[%c13, %c0_202, %c0_203, %c0_204], %232 {strides = array<i32>} : memref<16x4x16x4xf32, #tpu.memory_space<vmem>>, vector<1x1x16x4xf32>,
    %233 = vector.extract_strided_slice %228 {offsets = [0, 4], sizes = [16, 4], strides = [1, 1]} : vector<16x16xf32> to vector<16x4xf32>
    %c13_205 = arith.constant 13 : index
    %c1_206 = arith.constant 1 : index
    %c0_207 = arith.constant 0 : index
    %c0_208 = arith.constant 0 : index
    %234 = vector.load %arg5[%c13_205, %c1_206, %c0_207, %c0_208] : memref<16x4x16x4xf32, #tpu.memory_space<vmem>>, vector<1x1x16x4xf32>
    %235 = vector.shape_cast %234 : vector<1x1x16x4xf32> to vector<16x4xf32>
    %236 = vector.shape_cast %233 : vector<16x4xf32> to vector<1x1x16x4xf32>
    tpu.vector_store %arg5[%c13_205, %c1_206, %c0_207, %c0_208], %236 {strides = array<i32>} : memref<16x4x16x4xf32, #tpu.memory_space<vmem>>, vector<1x1x16x4xf32>,
    %237 = vector.extract_strided_slice %228 {offsets = [0, 8], sizes = [16, 4], strides = [1, 1]} : vector<16x16xf32> to vector<16x4xf32>
    %c13_209 = arith.constant 13 : index
    %c2_210 = arith.constant 2 : index
    %c0_211 = arith.constant 0 : index
    %c0_212 = arith.constant 0 : index
    %238 = vector.load %arg5[%c13_209, %c2_210, %c0_211, %c0_212] : memref<16x4x16x4xf32, #tpu.memory_space<vmem>>, vector<1x1x16x4xf32>
    %239 = vector.shape_cast %238 : vector<1x1x16x4xf32> to vector<16x4xf32>
    %240 = vector.shape_cast %237 : vector<16x4xf32> to vector<1x1x16x4xf32>
    tpu.vector_store %arg5[%c13_209, %c2_210, %c0_211, %c0_212], %240 {strides = array<i32>} : memref<16x4x16x4xf32, #tpu.memory_space<vmem>>, vector<1x1x16x4xf32>,
    %241 = vector.extract_strided_slice %228 {offsets = [0, 12], sizes = [16, 4], strides = [1, 1]} : vector<16x16xf32> to vector<16x4xf32>
    %c13_213 = arith.constant 13 : index
    %c3_214 = arith.constant 3 : index
    %c0_215 = arith.constant 0 : index
    %c0_216 = arith.constant 0 : index
    %242 = vector.load %arg5[%c13_213, %c3_214, %c0_215, %c0_216] : memref<16x4x16x4xf32, #tpu.memory_space<vmem>>, vector<1x1x16x4xf32>
    %243 = vector.shape_cast %242 : vector<1x1x16x4xf32> to vector<16x4xf32>
    %244 = vector.shape_cast %241 : vector<16x4xf32> to vector<1x1x16x4xf32>
    tpu.vector_store %arg5[%c13_213, %c3_214, %c0_215, %c0_216], %244 {strides = array<i32>} : memref<16x4x16x4xf32, #tpu.memory_space<vmem>>, vector<1x1x16x4xf32>,
    %245 = vector.extract_strided_slice %6 {offsets = [224, 0], sizes = [16, 16], strides = [1, 1]} : vector<256x16xf32> to vector<16x16xf32>
    %246 = vector.extract_strided_slice %245 {offsets = [0, 0], sizes = [16, 4], strides = [1, 1]} : vector<16x16xf32> to vector<16x4xf32>
    %c14 = arith.constant 14 : index
    %c0_217 = arith.constant 0 : index
    %c0_218 = arith.constant 0 : index
    %c0_219 = arith.constant 0 : index
    %247 = vector.load %arg5[%c14, %c0_217, %c0_218, %c0_219] : memref<16x4x16x4xf32, #tpu.memory_space<vmem>>, vector<1x1x16x4xf32>
    %248 = vector.shape_cast %247 : vector<1x1x16x4xf32> to vector<16x4xf32>
    %249 = vector.shape_cast %246 : vector<16x4xf32> to vector<1x1x16x4xf32>
    tpu.vector_store %arg5[%c14, %c0_217, %c0_218, %c0_219], %249 {strides = array<i32>} : memref<16x4x16x4xf32, #tpu.memory_space<vmem>>, vector<1x1x16x4xf32>,
    %250 = vector.extract_strided_slice %245 {offsets = [0, 4], sizes = [16, 4], strides = [1, 1]} : vector<16x16xf32> to vector<16x4xf32>
    %c14_220 = arith.constant 14 : index
    %c1_221 = arith.constant 1 : index
    %c0_222 = arith.constant 0 : index
    %c0_223 = arith.constant 0 : index
    %251 = vector.load %arg5[%c14_220, %c1_221, %c0_222, %c0_223] : memref<16x4x16x4xf32, #tpu.memory_space<vmem>>, vector<1x1x16x4xf32>
    %252 = vector.shape_cast %251 : vector<1x1x16x4xf32> to vector<16x4xf32>
    %253 = vector.shape_cast %250 : vector<16x4xf32> to vector<1x1x16x4xf32>
    tpu.vector_store %arg5[%c14_220, %c1_221, %c0_222, %c0_223], %253 {strides = array<i32>} : memref<16x4x16x4xf32, #tpu.memory_space<vmem>>, vector<1x1x16x4xf32>,
    %254 = vector.extract_strided_slice %245 {offsets = [0, 8], sizes = [16, 4], strides = [1, 1]} : vector<16x16xf32> to vector<16x4xf32>
    %c14_224 = arith.constant 14 : index
    %c2_225 = arith.constant 2 : index
    %c0_226 = arith.constant 0 : index
    %c0_227 = arith.constant 0 : index
    %255 = vector.load %arg5[%c14_224, %c2_225, %c0_226, %c0_227] : memref<16x4x16x4xf32, #tpu.memory_space<vmem>>, vector<1x1x16x4xf32>
    %256 = vector.shape_cast %255 : vector<1x1x16x4xf32> to vector<16x4xf32>
    %257 = vector.shape_cast %254 : vector<16x4xf32> to vector<1x1x16x4xf32>
    tpu.vector_store %arg5[%c14_224, %c2_225, %c0_226, %c0_227], %257 {strides = array<i32>} : memref<16x4x16x4xf32, #tpu.memory_space<vmem>>, vector<1x1x16x4xf32>,
    %258 = vector.extract_strided_slice %245 {offsets = [0, 12], sizes = [16, 4], strides = [1, 1]} : vector<16x16xf32> to vector<16x4xf32>
    %c14_228 = arith.constant 14 : index
    %c3_229 = arith.constant 3 : index
    %c0_230 = arith.constant 0 : index
    %c0_231 = arith.constant 0 : index
    %259 = vector.load %arg5[%c14_228, %c3_229, %c0_230, %c0_231] : memref<16x4x16x4xf32, #tpu.memory_space<vmem>>, vector<1x1x16x4xf32>
    %260 = vector.shape_cast %259 : vector<1x1x16x4xf32> to vector<16x4xf32>
    %261 = vector.shape_cast %258 : vector<16x4xf32> to vector<1x1x16x4xf32>
    tpu.vector_store %arg5[%c14_228, %c3_229, %c0_230, %c0_231], %261 {strides = array<i32>} : memref<16x4x16x4xf32, #tpu.memory_space<vmem>>, vector<1x1x16x4xf32>,
    %262 = vector.extract_strided_slice %6 {offsets = [240, 0], sizes = [16, 16], strides = [1, 1]} : vector<256x16xf32> to vector<16x16xf32>
    %263 = vector.extract_strided_slice %262 {offsets = [0, 0], sizes = [16, 4], strides = [1, 1]} : vector<16x16xf32> to vector<16x4xf32>
    %c15 = arith.constant 15 : index
    %c0_232 = arith.constant 0 : index
    %c0_233 = arith.constant 0 : index
    %c0_234 = arith.constant 0 : index
    %264 = vector.load %arg5[%c15, %c0_232, %c0_233, %c0_234] : memref<16x4x16x4xf32, #tpu.memory_space<vmem>>, vector<1x1x16x4xf32>
    %265 = vector.shape_cast %264 : vector<1x1x16x4xf32> to vector<16x4xf32>
    %266 = vector.shape_cast %263 : vector<16x4xf32> to vector<1x1x16x4xf32>
    tpu.vector_store %arg5[%c15, %c0_232, %c0_233, %c0_234], %266 {strides = array<i32>} : memref<16x4x16x4xf32, #tpu.memory_space<vmem>>, vector<1x1x16x4xf32>,
    %267 = vector.extract_strided_slice %262 {offsets = [0, 4], sizes = [16, 4], strides = [1, 1]} : vector<16x16xf32> to vector<16x4xf32>
    %c15_235 = arith.constant 15 : index
    %c1_236 = arith.constant 1 : index
    %c0_237 = arith.constant 0 : index
    %c0_238 = arith.constant 0 : index
    %268 = vector.load %arg5[%c15_235, %c1_236, %c0_237, %c0_238] : memref<16x4x16x4xf32, #tpu.memory_space<vmem>>, vector<1x1x16x4xf32>
    %269 = vector.shape_cast %268 : vector<1x1x16x4xf32> to vector<16x4xf32>
    %270 = vector.shape_cast %267 : vector<16x4xf32> to vector<1x1x16x4xf32>
    tpu.vector_store %arg5[%c15_235, %c1_236, %c0_237, %c0_238], %270 {strides = array<i32>} : memref<16x4x16x4xf32, #tpu.memory_space<vmem>>, vector<1x1x16x4xf32>,
    %271 = vector.extract_strided_slice %262 {offsets = [0, 8], sizes = [16, 4], strides = [1, 1]} : vector<16x16xf32> to vector<16x4xf32>
    %c15_239 = arith.constant 15 : index
    %c2_240 = arith.constant 2 : index
    %c0_241 = arith.constant 0 : index
    %c0_242 = arith.constant 0 : index
    %272 = vector.load %arg5[%c15_239, %c2_240, %c0_241, %c0_242] : memref<16x4x16x4xf32, #tpu.memory_space<vmem>>, vector<1x1x16x4xf32>
    %273 = vector.shape_cast %272 : vector<1x1x16x4xf32> to vector<16x4xf32>
    %274 = vector.shape_cast %271 : vector<16x4xf32> to vector<1x1x16x4xf32>
    tpu.vector_store %arg5[%c15_239, %c2_240, %c0_241, %c0_242], %274 {strides = array<i32>} : memref<16x4x16x4xf32, #tpu.memory_space<vmem>>, vector<1x1x16x4xf32>,
    %275 = vector.extract_strided_slice %262 {offsets = [0, 12], sizes = [16, 4], strides = [1, 1]} : vector<16x16xf32> to vector<16x4xf32>
    %c15_243 = arith.constant 15 : index
    %c3_244 = arith.constant 3 : index
    %c0_245 = arith.constant 0 : index
    %c0_246 = arith.constant 0 : index
    %276 = vector.load %arg5[%c15_243, %c3_244, %c0_245, %c0_246] : memref<16x4x16x4xf32, #tpu.memory_space<vmem>>, vector<1x1x16x4xf32>
    %277 = vector.shape_cast %276 : vector<1x1x16x4xf32> to vector<16x4xf32>
    %278 = vector.shape_cast %275 : vector<16x4xf32> to vector<1x1x16x4xf32>
    tpu.vector_store %arg5[%c15_243, %c3_244, %c0_245, %c0_246], %278 {strides = array<i32>} : memref<16x4x16x4xf32, #tpu.memory_space<vmem>>, vector<1x1x16x4xf32>,
    return
  }
  func.func @transform_0(%arg0: i32, %arg1: i32) -> (i32, i32, i32) {
    %c0_i32 = arith.constant 0 : i32
    %c0_i32_0 = arith.constant 0 : i32
    return %arg0, %c0_i32, %arg1 : i32, i32, i32
  }
  func.func @transform_1(%arg0: i32, %arg1: i32) -> (i32, i32) {
    %c0_i32 = arith.constant 0 : i32
    %c0_i32_0 = arith.constant 0 : i32
    %c0_i32_1 = arith.constant 0 : i32
    return %c0_i32, %c0_i32_0 : i32, i32
  }
  func.func @transform_2(%arg0: i32, %arg1: i32) -> (i32, i32) {
    %c0_i32 = arith.constant 0 : i32
    %c0_i32_0 = arith.constant 0 : i32
    %c0_i32_1 = arith.constant 0 : i32
    return %c0_i32, %c0_i32_0 : i32, i32
  }
  func.func @transform_3(%arg0: i32, %arg1: i32) -> (i32, i32, i32, i32) {
    %c1_i32 = arith.constant 1 : i32
    %0 = arith.muli %arg0, %c1_i32 : i32
    %1 = arith.addi %0, %arg1 : i32
    %c0_i32 = arith.constant 0 : i32
    %c0_i32_0 = arith.constant 0 : i32
    %c0_i32_1 = arith.constant 0 : i32
    %c0_i32_2 = arith.constant 0 : i32
    return %1, %c0_i32, %c0_i32_0, %c0_i32_1 : i32, i32, i32, i32
  }
}

</mosaic_0001>

<llo_original>
// kernel: tpu_custom_call.1
$region0: #{tpu_custom_call.1}
  #allocation0 [shape = 'u32[]', space=smem, size = 0x4, offset = 0x4, fixed_abs, tag = 'smem constant byte address 0x4 - core index']
  #allocation1 [shape = 'u32[144,128]{1,0:T(1,128)}', space=vmem, size = 0x12000, scoped, tag = 'internal scratch']
  %s0 = inlined_call_operand.hbm [shape: f32[2,4,256], index: 0, kind: input, shape index: {}]
  %s1 = inlined_call_operand.hbm [shape: f32[4,16], index: 1, kind: input, shape index: {}]
  %s2 = inlined_call_operand.vmem [shape: f32[1,16], index: 2, kind: input, shape index: {}]
  %s3 = inlined_call_operand.vmem [shape: f32[32,4,16,4], index: 3, kind: output, shape index: {}]
  %s4 = sld [smem:[#allocation0]]
  $region53: #{tpu_custom_call.1} parent=0
    _
  %s6 = ssub.s32 1, %s4
  %s7 = scalar_select 0, %s6, %s4
  $region1: #{tpu_custom_call.1} parent=0
    #allocation2 [shape = 'u8[8192]{0}', space=vmem, size = 0x2000, scoped, tag = 'input window, operand 0']
    #allocation3 [shape = 's32[2]{0}', space=sflag, size = 0x8, scoped, tag = 'scoped memory for tpu_custom_call.1']
    #allocation4 [shape = 'u8[2048]{0}', space=vmem, size = 0x800, scoped, tag = 'input window, operand 1, single buffered']
    #allocation5 [shape = 's32[1]{0}', space=sflag, size = 0x4, scoped, tag = 'scoped memory for tpu_custom_call.1']
    %8 = vsyncpa [#allocation3], 0
    %s9 = scalar_lea.sflag [#allocation3], 1
    %10 = vsyncpa %s9, 0
    %11 = vsyncpa [#allocation5], 0
    loop: start=0, step=1, limit=4
    $region2: #{tpu_custom_call.1} parent=1 // loop_pre_header
      _
    $region3: #{tpu_custom_call.1} parent=1 // loop_header
      %s13 = sphi 0, %s17
      %p14 = scmp.ge.s32.totalorder %s13, 4
      %s20 = sphi 0, %s32
      %s21 = sphi 0, %s28
      %s22 = sphi 0, %s20
      %s23 = sphi 0, %s21
      %s24 = sphi 0, %s22
      %s25 = sphi 0, %s23
      %s37 = sphi 0, %s39
      %s40 = sphi 0, %s37
      %s41 = sphi 0, %s40
      %s57 = sphi 0, %s41
      %s61 = sphi 0, %s61
      %s63 = sphi 0, %s61
      %s64 = sphi 0, %s63
      %s78 = sphi 0, %s64
      %s82 = sphi 0, %s82
      %s84 = sphi 0, %s82
      %s85 = sphi 0, %s84
      %s99 = sphi 0, %s85
      %s107 = sphi 0, %s109
      %s110 = sphi 0, %s107
      %s111 = sphi 0, %s110
      %s127 = sphi 0, %s111
    $region4: #{tpu_custom_call.1} parent=1 // loop_header_branch
      %16 = sbr.rel (%p14) target = $region8
    $region5: #{tpu_custom_call.1} parent=1 // loop_body
      %s18 = ssub.s32 %s13, 1
      %s19 = ssub.s32 %s13, 2
      %s26 = sadd.s32 1, %s21
      %p27 = scmp.ge.s32.totalorder %s26, 1
      %s28 = scalar_select %p27, 0, %s26
      %s29 = sadd.s32 1, %s20
      %s30 = scalar_select %p27, %s29, %s20
      %p31 = scmp.ge.s32.totalorder %s30, 2
      %s32 = scalar_select %p31, 0, %s30
      %s33 = ssub.s32 %s20, %s32
      %s34 = ssub.s32 %s21, %s28
      %s35 = sor.u32 %s33, %s34
      %p36 = scmp.eq.s32.totalorder %s35, 0
      %s38 = sadd.s32 %s37, 1
      %s39 = scalar_select %p36, %s37, %s38
      %p42 = pneg %p36
      %p43 = scmp.eq.s32.totalorder %s13, 1
      %p44 = por %p42, %p43
      %p45 = scmp.ne.s32.totalorder %s37, %s40
      %p46 = scmp.eq.s32.totalorder %s13, 0
      %p47 = por %p45, %p46
      %p48 = scmp.ne.s32.totalorder %s37, %s40
      %p49 = scmp.eq.s32.totalorder %s18, 1
      %p50 = por %p48, %p49
      %p51 = scmp.ne.s32.totalorder %s40, %s41
      %p52 = scmp.eq.s32.totalorder %s18, 0
      %p53 = por %p51, %p52
      %p54 = scmp.ne.s32.totalorder %s40, %s41
      %p55 = scmp.eq.s32.totalorder %s19, 1
      %p56 = por %p54, %p55
      %p58 = scmp.ne.s32.totalorder %s41, %s57
      %p59 = scmp.eq.s32.totalorder %s19, 0
      %p60 = por %p58, %p59
      %s62 = sadd.s32 %s61, 1
      %p65 = scmp.eq.s32.totalorder %s13, 1
      %p66 = scmp.ne.s32.totalorder %s61, %s63
      %p67 = scmp.eq.s32.totalorder %s13, 0
      %p68 = por %p66, %p67
      %p69 = scmp.ne.s32.totalorder %s61, %s63
      %p70 = scmp.eq.s32.totalorder %s18, 1
      %p71 = por %p69, %p70
      %p72 = scmp.ne.s32.totalorder %s63, %s64
      %p73 = scmp.eq.s32.totalorder %s18, 0
      %p74 = por %p72, %p73
      %p75 = scmp.ne.s32.totalorder %s63, %s64
      %p76 = scmp.eq.s32.totalorder %s19, 1
      %p77 = por %p75, %p76
      %p79 = scmp.ne.s32.totalorder %s64, %s78
      %p80 = scmp.eq.s32.totalorder %s19, 0
      %p81 = por %p79, %p80
      %s83 = sadd.s32 %s82, 1
      %p86 = scmp.eq.s32.totalorder %s13, 1
      %p87 = scmp.ne.s32.totalorder %s82, %s84
      %p88 = scmp.eq.s32.totalorder %s13, 0
      %p89 = por %p87, %p88
      %p90 = scmp.ne.s32.totalorder %s82, %s84
      %p91 = scmp.eq.s32.totalorder %s18, 1
      %p92 = por %p90, %p91
      %p93 = scmp.ne.s32.totalorder %s84, %s85
      %p94 = scmp.eq.s32.totalorder %s18, 0
      %p95 = por %p93, %p94
      %p96 = scmp.ne.s32.totalorder %s84, %s85
      %p97 = scmp.eq.s32.totalorder %s19, 1
      %p98 = por %p96, %p97
      %p100 = scmp.ne.s32.totalorder %s85, %s99
      %p101 = scmp.eq.s32.totalorder %s19, 0
      %p102 = por %p100, %p101
      %s103 = sadd.s32 %s20, %s21
      %s104 = sadd.s32 %s32, %s28
      %s105 = ssub.s32 %s103, %s104
      %p106 = scmp.eq.s32.totalorder %s105, 0
      %s108 = sadd.s32 %s107, 1
      %s109 = scalar_select %p106, %s107, %s108
      %p112 = pneg %p106
      %p113 = scmp.eq.s32.totalorder %s13, 1
      %p114 = por %p112, %p113
      %p115 = scmp.ne.s32.totalorder %s107, %s110
      %p116 = scmp.eq.s32.totalorder %s13, 0
      %p117 = por %p115, %p116
      %p118 = scmp.ne.s32.totalorder %s107, %s110
      %p119 = scmp.eq.s32.totalorder %s18, 1
      %p120 = por %p118, %p119
      %p121 = scmp.ne.s32.totalorder %s110, %s111
      %p122 = scmp.eq.s32.totalorder %s18, 0
      %p123 = por %p121, %p122
      %p124 = scmp.ne.s32.totalorder %s110, %s111
      %p125 = scmp.eq.s32.totalorder %s19, 1
      %p126 = por %p124, %p125
      %p128 = scmp.ne.s32.totalorder %s111, %s127
      %p129 = scmp.eq.s32.totalorder %s19, 0
      %p130 = por %p128, %p129
      %p131 = scmp.le.s32.totalorder 1, %s13
      %p132 = scmp.lt.s32.totalorder %s13, 3
      %p133 = pnand %p131, %p132
      %p134 = pneg %p133
      // Predicated region
      $region9: #{tpu_custom_call.1} parent=5 // pred_check
        _
      $region10: #{tpu_custom_call.1} parent=5 // pred_check_branch
        %136 = sbr.rel (%p133) target = $region12
      $region11: #{tpu_custom_call.1} parent=5 // pred_region
        %s137 = ssub.s32 %s13, 1
        // Predicated region
        $region13: #{tpu_custom_call.1} parent=11 // pred_check
          %p138 = pneg %p74
        $region14: #{tpu_custom_call.1} parent=11 // pred_check_branch
          %140 = sbr.rel (%p138) target = $region16
        $region15: #{tpu_custom_call.1} parent=11 // pred_region
          %s142 = ssub.s32 64, 64
          %143 = vsyncadd [#allocation5], %s142
          %s145 = sshll.u32 [#allocation4], 4
          %s146 = int_to_ptr.vmem [resolvable:$true] %s145
          %148 = dma.hbm_to_vmem [thread:$0]  %s1, 64, %s146, [#allocation5]
        $region16: #{tpu_custom_call.1} parent=11 // pred_fallthru
          _
        // Predicated region
        $region17: #{tpu_custom_call.1} parent=11 // pred_check
          %p149 = pneg %p95
        $region18: #{tpu_custom_call.1} parent=11 // pred_check_branch
          %151 = sbr.rel (%p149) target = $region20
        $region19: #{tpu_custom_call.1} parent=11 // pred_region
          _
        $region20: #{tpu_custom_call.1} parent=11 // pred_fallthru
          _
      $region12: #{tpu_custom_call.1} parent=5 // pred_fallthru
        _
      %p152 = scmp.lt.s32.totalorder %s13, 2
      // Predicated region
      $region21: #{tpu_custom_call.1} parent=5 // pred_check
        %p153 = pneg %p152
      $region22: #{tpu_custom_call.1} parent=5 // pred_check_branch
        %155 = sbr.rel (%p153) target = $region24
      $region23: #{tpu_custom_call.1} parent=5 // pred_region
        // Predicated region
        $region25: #{tpu_custom_call.1} parent=23 // pred_check
          %p156 = pneg %p47
        $region26: #{tpu_custom_call.1} parent=23 // pred_check_branch
          %158 = sbr.rel (%p156) target = $region28
        $region27: #{tpu_custom_call.1} parent=23 // pred_region
          %s159 = sand.u32 %s37, 1
          %s160 = scalar_lea.sflag [#allocation3], %s159
          %s161 = sand.u32 %s37, 1
          %s162 = smul.addr %s161, 8
          %s163 = scalar_lea.vmem [#allocation2], %s162
          %s164 = smul.u32 2, %s21
          %s166 = ssub.s32 128, 128
          %167 = vsyncadd %s160, %s166
          %s168 = smul.addr %s20, 2
          %s169 = sadd.s32 %s164, %s168
          %s170 = smul.addr %s169, 64
          %s171 = scalar_lea.hbm %s0, %s170
          %s173 = sshll.u32 %s163, 4
          %s174 = int_to_ptr.vmem [resolvable:$true] %s173
          %176 = dma.hbm_to_vmem [thread:$0]  %s171, 128, %s174, %s160
        $region28: #{tpu_custom_call.1} parent=23 // pred_fallthru
          _
      $region24: #{tpu_custom_call.1} parent=5 // pred_fallthru
        _
      %p177 = scmp.le.s32.totalorder 1, %s13
      %p178 = scmp.lt.s32.totalorder %s13, 3
      %p179 = pnand %p177, %p178
      %p180 = pneg %p179
      // Predicated region
      $region29: #{tpu_custom_call.1} parent=5 // pred_check
        _
      $region30: #{tpu_custom_call.1} parent=5 // pred_check_branch
        %182 = sbr.rel (%p179) target = $region32
      $region31: #{tpu_custom_call.1} parent=5 // pred_region
        %s183 = ssub.s32 %s13, 1
        %s184 = sand.u32 %s40, 1
        %s185 = scalar_lea.sflag [#allocation3], %s184
        %s186 = sand.u32 %s40, 1
        %s187 = smul.addr %s186, 8
        %s188 = scalar_lea.vmem [#allocation2], %s187
        // Predicated region
        $region33: #{tpu_custom_call.1} parent=31 // pred_check
          %p189 = pneg %p53
        $region34: #{tpu_custom_call.1} parent=31 // pred_check_branch
          %191 = sbr.rel (%p189) target = $region36
        $region35: #{tpu_custom_call.1} parent=31 // pred_region
          %192 = dma.done %s185, 128
        $region36: #{tpu_custom_call.1} parent=31 // pred_fallthru
          _
        // Predicated region
        $region37: #{tpu_custom_call.1} parent=31 // pred_check
          %p193 = pneg %p74
        $region38: #{tpu_custom_call.1} parent=31 // pred_check_branch
          %195 = sbr.rel (%p193) target = $region40
        $region39: #{tpu_custom_call.1} parent=31 // pred_region
          %196 = dma.done [#allocation5], 64
        $region40: #{tpu_custom_call.1} parent=31 // pred_fallthru
          _
        %s197 = sand.u32 %s40, 1
        %s198 = scalar_lea.sflag [#allocation3], %s197
        %s199 = sand.u32 %s40, 1
        %s200 = smul.addr %s199, 8
        %s201 = scalar_lea.vmem [#allocation2], %s200
        %p202 = pneg %p53
        %p203 = pneg %p50
        %p204 = pneg %p74
        %p205 = pneg %p71
        %p206 = pneg %p95
        %p207 = pneg %p92
        %p208 = pneg %p123
        %p209 = pneg %p120
        %s210 = sadd.s32 %s22, %s23
        %s211 = smul.u32 16, %s210
        %p212 = scmp.lt.s32.totalorder %s211, 31
        %s213 = scalar_select %p212, %s211, 31
        %s214 = smul.addr %s213, 8
        %s215 = smul.addr %s214, 8
        %s216 = scalar_lea.vmem %s3, %s215
        %s217 = smul.u32 2, %s23
        %s218 = sadd.s32 %s22, %s23
        %s219 = smul.u32 16, %s218
        %p220 = scmp.lt.s32.totalorder %s219, 31
        %s221 = scalar_select %p220, %s219, 31
        %s222 = smul.addr %s221, 8
        %s223 = smul.addr %s222, 8
        %s224 = scalar_lea.vmem %s3, %s223
        %s225 = sadd.s32 %s22, %s23
        %s226 = smul.u32 16, %s225
        %v227 = vld [vmem:[%s188] sm:$0xff]
        %v228 = vld [vmem:[#allocation4] sm:$0xf]
        %v229 = vld [vmem:[%s2] sm:$0x1]
        %v231 = vlaneseq
        %v232 = vshrl.u32 %v231, 7
        %v233 = vsub.s32 0, %v232
        %v234 = vrot.slane %v229, %v233
        %v237 = vcombine.high %v227, %v227
        %239 = vxpose.xlu0.b32.start [1/16] %v227, 128
        %240 = vxpose.xlu0.b32.cont [2/16] 0.0, 128
        %241 = vxpose.xlu0.b32.cont [3/16] 0.0, 128
        %242 = vxpose.xlu0.b32.cont [4/16] 0.0, 128
        %243 = vxpose.xlu0.b32.cont [5/16] 0.0, 128
        %244 = vxpose.xlu0.b32.cont [6/16] 0.0, 128
        %245 = vxpose.xlu0.b32.cont [7/16] 0.0, 128
        %246 = vxpose.xlu0.b32.cont [8/16] 0.0, 128
        %247 = vxpose.xlu0.b32.cont [9/16] 0.0, 128
        %248 = vxpose.xlu0.b32.cont [10/16] 0.0, 128
        %249 = vxpose.xlu0.b32.cont [11/16] 0.0, 128
        %250 = vxpose.xlu0.b32.cont [12/16] 0.0, 128
        %251 = vxpose.xlu0.b32.cont [13/16] 0.0, 128
        %252 = vxpose.xlu0.b32.cont [14/16] 0.0, 128
        %253 = vxpose.xlu0.b32.cont [15/16] 0.0, 128
        %254 = vxpose.xlu0.b32.end [16/16] 0.0, 128
        %v255 = vpop.trf.xlu0
        %v256 = vpop.trf.xlu0
        %v257 = vpop.trf.xlu0
        %v258 = vpop.trf.xlu0
        %v259 = vpop.trf.xlu0
        %v260 = vpop.trf.xlu0
        %v261 = vpop.trf.xlu0
        %v262 = vpop.trf.xlu0
        %v263 = vpop.trf.xlu0
        %v264 = vpop.trf.xlu0
        %v265 = vpop.trf.xlu0
        %v266 = vpop.trf.xlu0
        %v267 = vpop.trf.xlu0
        %v268 = vpop.trf.xlu0
        %v269 = vpop.trf.xlu0
        %v270 = vpop.trf.xlu0
        %271 = vxpose.xlu0.b32.start [1/16] %v237, 128
        %272 = vxpose.xlu0.b32.cont [2/16] 0.0, 128
        %273 = vxpose.xlu0.b32.cont [3/16] 0.0, 128
        %274 = vxpose.xlu0.b32.cont [4/16] 0.0, 128
        %275 = vxpose.xlu0.b32.cont [5/16] 0.0, 128
        %276 = vxpose.xlu0.b32.cont [6/16] 0.0, 128
        %277 = vxpose.xlu0.b32.cont [7/16] 0.0, 128
        %278 = vxpose.xlu0.b32.cont [8/16] 0.0, 128
        %279 = vxpose.xlu0.b32.cont [9/16] 0.0, 128
        %280 = vxpose.xlu0.b32.cont [10/16] 0.0, 128
        %281 = vxpose.xlu0.b32.cont [11/16] 0.0, 128
        %282 = vxpose.xlu0.b32.cont [12/16] 0.0, 128
        %283 = vxpose.xlu0.b32.cont [13/16] 0.0, 128
        %284 = vxpose.xlu0.b32.cont [14/16] 0.0, 128
        %285 = vxpose.xlu0.b32.cont [15/16] 0.0, 128
        %286 = vxpose.xlu0.b32.end [16/16] 0.0, 128
        %v287 = vpop.trf.xlu0
        %v288 = vpop.trf.xlu0
        %v289 = vpop.trf.xlu0
        %v290 = vpop.trf.xlu0
        %v291 = vpop.trf.xlu0
        %v292 = vpop.trf.xlu0
        %v293 = vpop.trf.xlu0
        %v294 = vpop.trf.xlu0
        %v295 = vpop.trf.xlu0
        %v296 = vpop.trf.xlu0
        %v297 = vpop.trf.xlu0
        %v298 = vpop.trf.xlu0
        %v299 = vpop.trf.xlu0
        %v300 = vpop.trf.xlu0
        %v301 = vpop.trf.xlu0
        %v302 = vpop.trf.xlu0
        %vm303 = vcmask 31744
        %v305 = vsel %vm303, %v255, 0
        %v308 = vsel %vm303, %v256, 0
        %v311 = vsel %vm303, %v257, 0
        %v314 = vsel %vm303, %v258, 0
        %v317 = vsel %vm303, %v259, 0
        %v320 = vsel %vm303, %v260, 0
        %v323 = vsel %vm303, %v261, 0
        %v326 = vsel %vm303, %v262, 0
        %v329 = vsel %vm303, %v263, 0
        %v332 = vsel %vm303, %v264, 0
        %v335 = vsel %vm303, %v265, 0
        %v338 = vsel %vm303, %v266, 0
        %v341 = vsel %vm303, %v267, 0
        %v344 = vsel %vm303, %v268, 0
        %v347 = vsel %vm303, %v269, 0
        %v350 = vsel %vm303, %v270, 0
        %v353 = vsel %vm303, %v287, 0
        %v356 = vsel %vm303, %v288, 0
        %v359 = vsel %vm303, %v289, 0
        %v362 = vsel %vm303, %v290, 0
        %v365 = vsel %vm303, %v291, 0
        %v368 = vsel %vm303, %v292, 0
        %v371 = vsel %vm303, %v293, 0
        %v374 = vsel %vm303, %v294, 0
        %v377 = vsel %vm303, %v295, 0
        %v380 = vsel %vm303, %v296, 0
        %v383 = vsel %vm303, %v297, 0
        %v386 = vsel %vm303, %v298, 0
        %v389 = vsel %vm303, %v299, 0
        %v392 = vsel %vm303, %v300, 0
        %v395 = vsel %vm303, %v301, 0
        %v398 = vsel %vm303, %v302, 0
        %vm400 = vcmask 1043456
        %v402 = vsel %vm400, %v228, 0
        %404 = vmatprep.subr.mxu0 0.0
        %405 = vmatpush1.msra.mxu0 %v402
        %406 = vmatprep.subr.mxu0 0.0
        %407 = vmatpush1.msra.mxu0 0.0
        %408 = vmatprep.subr.mxu0 0.0
        %409 = vmatpush1.msra.mxu0 0.0
        %410 = vmatprep.subr.mxu0 0.0
        %411 = vmatpush1.msra.mxu0 0.0
        %412 = vmatprep.subr.mxu0 0.0
        %413 = vmatpush1.msra.mxu0 0.0
        %414 = vmatprep.subr.mxu0 0.0
        %415 = vmatpush1.msra.mxu0 0.0
        %416 = vmatprep.subr.mxu0 0.0
        %417 = vmatpush1.msra.mxu0 0.0
        %418 = vmatprep.subr.mxu0 0.0
        %419 = vmatpush1.msra.mxu0 0.0
        %420 = vmatprep.subr.mxu0 0.0
        %421 = vmatpush1.msra.mxu0 0.0
        %422 = vmatprep.subr.mxu0 0.0
        %423 = vmatpush1.msra.mxu0 0.0
        %424 = vmatprep.subr.mxu0 0.0
        %425 = vmatpush1.msra.mxu0 0.0
        %426 = vmatprep.subr.mxu0 0.0
        %427 = vmatpush1.msra.mxu0 0.0
        %428 = vmatprep.subr.mxu0 0.0
        %429 = vmatpush1.msra.mxu0 0.0
        %430 = vmatprep.subr.mxu0 0.0
        %431 = vmatpush1.msra.mxu0 0.0
        %432 = vmatprep.subr.mxu0 0.0
        %433 = vmatpush1.msra.mxu0 0.0
        %434 = vmatprep.subr.mxu0 0.0
        %435 = vmatpush1.msra.mxu0 0.0
        %436 = vmatprep.subr.mxu0 0.0
        %437 = vmatpush1.msra.mxu0 0.0
        %438 = vmatprep.subr.mxu0 0.0
        %439 = vmatpush1.msra.mxu0 0.0
        %440 = vmatprep.subr.mxu0 0.0
        %441 = vmatpush1.msra.mxu0 0.0
        %442 = vmatprep.subr.mxu0 0.0
        %443 = vmatpush1.msra.mxu0 0.0
        %444 = vmatprep.subr.mxu0 0.0
        %445 = vmatpush1.msra.mxu0 0.0
        %446 = vmatprep.subr.mxu0 0.0
        %447 = vmatpush1.msra.mxu0 0.0
        %448 = vmatprep.subr.mxu0 0.0
        %449 = vmatpush1.msra.mxu0 0.0
        %450 = vmatprep.subr.mxu0 0.0
        %451 = vmatpush1.msra.mxu0 0.0
        %452 = vmatprep.subr.mxu0 0.0
        %453 = vmatpush1.msra.mxu0 0.0
        %454 = vmatprep.subr.mxu0 0.0
        %455 = vmatpush1.msra.mxu0 0.0
        %456 = vmatprep.subr.mxu0 0.0
        %457 = vmatpush1.msra.mxu0 0.0
        %458 = vmatprep.subr.mxu0 0.0
        %459 = vmatpush1.msra.mxu0 0.0
        %460 = vmatprep.subr.mxu0 0.0
        %461 = vmatpush1.msra.mxu0 0.0
        %462 = vmatprep.subr.mxu0 0.0
        %463 = vmatpush1.msra.mxu0 0.0
        %464 = vmatprep.subr.mxu0 0.0
        %465 = vmatpush1.msra.mxu0 0.0
        %466 = vmatprep.subr.mxu0 0.0
        %467 = vmatpush1.msra.mxu0 0.0
        %468 = vmatprep.mubr.f32.mxu0 0.0
        %469 = vmatmul.mubr.f32.gmra.mrb[0].mxu0 %v305
        %v470 = vpop.f32.mrb[0].mxu0
        %v471 = vadd.f32 %v234, %v470
        %v472 = vpop.f32.mrb[0].mxu0
        %473 = vmatprep.mubr.f32.mxu0 0.0
        %474 = vmatmul.mubr.f32.gmra.mrb[0].mxu0 %v308
        %v475 = vpop.f32.mrb[0].mxu0
        %v476 = vadd.f32 %v234, %v475
        %v477 = vpop.f32.mrb[0].mxu0
        %478 = vmatprep.mubr.f32.mxu0 0.0
        %479 = vmatmul.mubr.f32.gmra.mrb[0].mxu0 %v311
        %v480 = vpop.f32.mrb[0].mxu0
        %v481 = vadd.f32 %v234, %v480
        %v482 = vpop.f32.mrb[0].mxu0
        %483 = vmatprep.mubr.f32.mxu0 0.0
        %484 = vmatmul.mubr.f32.gmra.mrb[0].mxu0 %v314
        %v485 = vpop.f32.mrb[0].mxu0
        %v486 = vadd.f32 %v234, %v485
        %v487 = vpop.f32.mrb[0].mxu0
        %488 = vmatprep.mubr.f32.mxu0 0.0
        %489 = vmatmul.mubr.f32.gmra.mrb[0].mxu0 %v317
        %v490 = vpop.f32.mrb[0].mxu0
        %v491 = vadd.f32 %v234, %v490
        %v492 = vpop.f32.mrb[0].mxu0
        %493 = vmatprep.mubr.f32.mxu0 0.0
        %494 = vmatmul.mubr.f32.gmra.mrb[0].mxu0 %v320
        %v495 = vpop.f32.mrb[0].mxu0
        %v496 = vadd.f32 %v234, %v495
        %v497 = vpop.f32.mrb[0].mxu0
        %498 = vmatprep.mubr.f32.mxu0 0.0
        %499 = vmatmul.mubr.f32.gmra.mrb[0].mxu0 %v323
        %v500 = vpop.f32.mrb[0].mxu0
        %v501 = vadd.f32 %v234, %v500
        %v502 = vpop.f32.mrb[0].mxu0
        %503 = vmatprep.mubr.f32.mxu0 0.0
        %504 = vmatmul.mubr.f32.gmra.mrb[0].mxu0 %v326
        %v505 = vpop.f32.mrb[0].mxu0
        %v506 = vadd.f32 %v234, %v505
        %v507 = vpop.f32.mrb[0].mxu0
        %508 = vmatprep.mubr.f32.mxu0 0.0
        %509 = vmatmul.mubr.f32.gmra.mrb[0].mxu0 %v329
        %v510 = vpop.f32.mrb[0].mxu0
        %v511 = vadd.f32 %v234, %v510
        %v512 = vpop.f32.mrb[0].mxu0
        %513 = vmatprep.mubr.f32.mxu0 0.0
        %514 = vmatmul.mubr.f32.gmra.mrb[0].mxu0 %v332
        %v515 = vpop.f32.mrb[0].mxu0
        %v516 = vadd.f32 %v234, %v515
        %v517 = vpop.f32.mrb[0].mxu0
        %518 = vmatprep.mubr.f32.mxu0 0.0
        %519 = vmatmul.mubr.f32.gmra.mrb[0].mxu0 %v335
        %v520 = vpop.f32.mrb[0].mxu0
        %v521 = vadd.f32 %v234, %v520
        %v522 = vpop.f32.mrb[0].mxu0
        %523 = vmatprep.mubr.f32.mxu0 0.0
        %524 = vmatmul.mubr.f32.gmra.mrb[0].mxu0 %v338
        %v525 = vpop.f32.mrb[0].mxu0
        %v526 = vadd.f32 %v234, %v525
        %v527 = vpop.f32.mrb[0].mxu0
        %528 = vmatprep.mubr.f32.mxu0 0.0
        %529 = vmatmul.mubr.f32.gmra.mrb[0].mxu0 %v341
        %v530 = vpop.f32.mrb[0].mxu0
        %v531 = vadd.f32 %v234, %v530
        %v532 = vpop.f32.mrb[0].mxu0
        %533 = vmatprep.mubr.f32.mxu0 0.0
        %534 = vmatmul.mubr.f32.gmra.mrb[0].mxu0 %v344
        %v535 = vpop.f32.mrb[0].mxu0
        %v536 = vadd.f32 %v234, %v535
        %v537 = vpop.f32.mrb[0].mxu0
        %538 = vmatprep.mubr.f32.mxu0 0.0
        %539 = vmatmul.mubr.f32.gmra.mrb[0].mxu0 %v347
        %v540 = vpop.f32.mrb[0].mxu0
        %v541 = vadd.f32 %v234, %v540
        %v542 = vpop.f32.mrb[0].mxu0
        %543 = vmatprep.mubr.f32.mxu0 0.0
        %544 = vmatmul.mubr.f32.gmra.mrb[0].mxu0 %v350
        %v545 = vpop.f32.mrb[0].mxu0
        %v546 = vadd.f32 %v234, %v545
        %v547 = vpop.f32.mrb[0].mxu0
        %548 = vmatprep.mubr.f32.mxu0 0.0
        %549 = vmatmul.mubr.f32.gmra.mrb[0].mxu0 %v353
        %v550 = vpop.f32.mrb[0].mxu0
        %v551 = vadd.f32 %v234, %v550
        %v552 = vpop.f32.mrb[0].mxu0
        %553 = vmatprep.mubr.f32.mxu0 0.0
        %554 = vmatmul.mubr.f32.gmra.mrb[0].mxu0 %v356
        %v555 = vpop.f32.mrb[0].mxu0
        %v556 = vadd.f32 %v234, %v555
        %v557 = vpop.f32.mrb[0].mxu0
        %558 = vmatprep.mubr.f32.mxu0 0.0
        %559 = vmatmul.mubr.f32.gmra.mrb[0].mxu0 %v359
        %v560 = vpop.f32.mrb[0].mxu0
        %v561 = vadd.f32 %v234, %v560
        %v562 = vpop.f32.mrb[0].mxu0
        %563 = vmatprep.mubr.f32.mxu0 0.0
        %564 = vmatmul.mubr.f32.gmra.mrb[0].mxu0 %v362
        %v565 = vpop.f32.mrb[0].mxu0
        %v566 = vadd.f32 %v234, %v565
        %v567 = vpop.f32.mrb[0].mxu0
        %568 = vmatprep.mubr.f32.mxu0 0.0
        %569 = vmatmul.mubr.f32.gmra.mrb[0].mxu0 %v365
        %v570 = vpop.f32.mrb[0].mxu0
        %v571 = vadd.f32 %v234, %v570
        %v572 = vpop.f32.mrb[0].mxu0
        %573 = vmatprep.mubr.f32.mxu0 0.0
        %574 = vmatmul.mubr.f32.gmra.mrb[0].mxu0 %v368
        %v575 = vpop.f32.mrb[0].mxu0
        %v576 = vadd.f32 %v234, %v575
        %v577 = vpop.f32.mrb[0].mxu0
        %578 = vmatprep.mubr.f32.mxu0 0.0
        %579 = vmatmul.mubr.f32.gmra.mrb[0].mxu0 %v371
        %v580 = vpop.f32.mrb[0].mxu0
        %v581 = vadd.f32 %v234, %v580
        %v582 = vpop.f32.mrb[0].mxu0
        %583 = vmatprep.mubr.f32.mxu0 0.0
        %584 = vmatmul.mubr.f32.gmra.mrb[0].mxu0 %v374
        %v585 = vpop.f32.mrb[0].mxu0
        %v586 = vadd.f32 %v234, %v585
        %v587 = vpop.f32.mrb[0].mxu0
        %588 = vmatprep.mubr.f32.mxu0 0.0
        %589 = vmatmul.mubr.f32.gmra.mrb[0].mxu0 %v377
        %v590 = vpop.f32.mrb[0].mxu0
        %v591 = vadd.f32 %v234, %v590
        %v592 = vpop.f32.mrb[0].mxu0
        %593 = vmatprep.mubr.f32.mxu0 0.0
        %594 = vmatmul.mubr.f32.gmra.mrb[0].mxu0 %v380
        %v595 = vpop.f32.mrb[0].mxu0
        %v596 = vadd.f32 %v234, %v595
        %v597 = vpop.f32.mrb[0].mxu0
        %598 = vmatprep.mubr.f32.mxu0 0.0
        %599 = vmatmul.mubr.f32.gmra.mrb[0].mxu0 %v383
        %v600 = vpop.f32.mrb[0].mxu0
        %v601 = vadd.f32 %v234, %v600
        %v602 = vpop.f32.mrb[0].mxu0
        %603 = vmatprep.mubr.f32.mxu0 0.0
        %604 = vmatmul.mubr.f32.gmra.mrb[0].mxu0 %v386
        %v605 = vpop.f32.mrb[0].mxu0
        %v606 = vadd.f32 %v234, %v605
        %v607 = vpop.f32.mrb[0].mxu0
        %608 = vmatprep.mubr.f32.mxu0 0.0
        %609 = vmatmul.mubr.f32.gmra.mrb[0].mxu0 %v389
        %v610 = vpop.f32.mrb[0].mxu0
        %v611 = vadd.f32 %v234, %v610
        %v612 = vpop.f32.mrb[0].mxu0
        %613 = vmatprep.mubr.f32.mxu0 0.0
        %614 = vmatmul.mubr.f32.gmra.mrb[0].mxu0 %v392
        %v615 = vpop.f32.mrb[0].mxu0
        %v616 = vadd.f32 %v234, %v615
        %v617 = vpop.f32.mrb[0].mxu0
        %618 = vmatprep.mubr.f32.mxu0 0.0
        %619 = vmatmul.mubr.f32.gmra.mrb[0].mxu0 %v395
        %v620 = vpop.f32.mrb[0].mxu0
        %v621 = vadd.f32 %v234, %v620
        %v622 = vpop.f32.mrb[0].mxu0
        %623 = vmatprep.mubr.f32.mxu0 0.0
        %624 = vmatmul.mubr.f32.gmra.mrb[0].mxu0 %v398
        %v625 = vpop.f32.mrb[0].mxu0
        %v626 = vadd.f32 %v234, %v625
        %v627 = vpop.f32.mrb[0].mxu0
        %628 = vdwg.mxu0
        %629 = vst.msk [vmem:[%s224] sm:$0xff] %vm303, %v471
        %630 = vst.msk [vmem:[%s224 + $0x8] sm:$0xff] %vm303, %v476
        %633 = vrot.lane.b32.xlu0 %v471, 124
        %v634 = vpop.permute.xlu0 %633
        %635 = vrot.lane.b32.xlu0 %v476, 124
        %v636 = vpop.permute.xlu0 %635
        %s639 = scalar_lea.vmem %s224, 16
        %640 = vst.msk [vmem:[%s639] sm:$0xff] %vm303, %v634
        %641 = vst.msk [vmem:[%s639 + $0x8] sm:$0xff] %vm303, %v636
        %642 = vrot.lane.b32.xlu0 %v471, 120
        %v643 = vpop.permute.xlu0 %642
        %644 = vrot.lane.b32.xlu0 %v476, 120
        %v645 = vpop.permute.xlu0 %644
        %s648 = scalar_lea.vmem %s224, 32
        %649 = vst.msk [vmem:[%s648] sm:$0xff] %vm303, %v643
        %650 = vst.msk [vmem:[%s648 + $0x8] sm:$0xff] %vm303, %v645
        %651 = vrot.lane.b32.xlu0 %v471, 116
        %v652 = vpop.permute.xlu0 %651
        %653 = vrot.lane.b32.xlu0 %v476, 116
        %v654 = vpop.permute.xlu0 %653
        %s657 = scalar_lea.vmem %s224, 48
        %658 = vst.msk [vmem:[%s657] sm:$0xff] %vm303, %v652
        %659 = vst.msk [vmem:[%s657 + $0x8] sm:$0xff] %vm303, %v654
        %s660 = scalar_lea.vmem %s224, 64
        %661 = vst.msk [vmem:[%s660] sm:$0xff] %vm303, %v481
        %662 = vst.msk [vmem:[%s660 + $0x8] sm:$0xff] %vm303, %v486
        %665 = vrot.lane.b32.xlu0 %v481, 124
        %v666 = vpop.permute.xlu0 %665
        %667 = vrot.lane.b32.xlu0 %v486, 124
        %v668 = vpop.permute.xlu0 %667
        %s671 = scalar_lea.vmem %s224, 80
        %672 = vst.msk [vmem:[%s671] sm:$0xff] %vm303, %v666
        %673 = vst.msk [vmem:[%s671 + $0x8] sm:$0xff] %vm303, %v668
        %674 = vrot.lane.b32.xlu0 %v481, 120
        %v675 = vpop.permute.xlu0 %674
        %676 = vrot.lane.b32.xlu0 %v486, 120
        %v677 = vpop.permute.xlu0 %676
        %s680 = scalar_lea.vmem %s224, 96
        %681 = vst.msk [vmem:[%s680] sm:$0xff] %vm303, %v675
        %682 = vst.msk [vmem:[%s680 + $0x8] sm:$0xff] %vm303, %v677
        %683 = vrot.lane.b32.xlu0 %v481, 116
        %v684 = vpop.permute.xlu0 %683
        %685 = vrot.lane.b32.xlu0 %v486, 116
        %v686 = vpop.permute.xlu0 %685
        %s689 = scalar_lea.vmem %s224, 112
        %690 = vst.msk [vmem:[%s689] sm:$0xff] %vm303, %v684
        %691 = vst.msk [vmem:[%s689 + $0x8] sm:$0xff] %vm303, %v686
        %s692 = scalar_lea.vmem %s224, 128
        %693 = vst.msk [vmem:[%s692] sm:$0xff] %vm303, %v491
        %694 = vst.msk [vmem:[%s692 + $0x8] sm:$0xff] %vm303, %v496
        %697 = vrot.lane.b32.xlu0 %v491, 124
        %v698 = vpop.permute.xlu0 %697
        %699 = vrot.lane.b32.xlu0 %v496, 124
        %v700 = vpop.permute.xlu0 %699
        %s703 = scalar_lea.vmem %s224, 144
        %704 = vst.msk [vmem:[%s703] sm:$0xff] %vm303, %v698
        %705 = vst.msk [vmem:[%s703 + $0x8] sm:$0xff] %vm303, %v700
        %706 = vrot.lane.b32.xlu0 %v491, 120
        %v707 = vpop.permute.xlu0 %706
        %708 = vrot.lane.b32.xlu0 %v496, 120
        %v709 = vpop.permute.xlu0 %708
        %s712 = scalar_lea.vmem %s224, 160
        %713 = vst.msk [vmem:[%s712] sm:$0xff] %vm303, %v707
        %714 = vst.msk [vmem:[%s712 + $0x8] sm:$0xff] %vm303, %v709
        %715 = vrot.lane.b32.xlu0 %v491, 116
        %v716 = vpop.permute.xlu0 %715
        %717 = vrot.lane.b32.xlu0 %v496, 116
        %v718 = vpop.permute.xlu0 %717
        %s721 = scalar_lea.vmem %s224, 176
        %722 = vst.msk [vmem:[%s721] sm:$0xff] %vm303, %v716
        %723 = vst.msk [vmem:[%s721 + $0x8] sm:$0xff] %vm303, %v718
        %s724 = scalar_lea.vmem %s224, 192
        %725 = vst.msk [vmem:[%s724] sm:$0xff] %vm303, %v501
        %726 = vst.msk [vmem:[%s724 + $0x8] sm:$0xff] %vm303, %v506
        %729 = vrot.lane.b32.xlu0 %v501, 124
        %v730 = vpop.permute.xlu0 %729
        %731 = vrot.lane.b32.xlu0 %v506, 124
        %v732 = vpop.permute.xlu0 %731
        %s735 = scalar_lea.vmem %s224, 208
        %736 = vst.msk [vmem:[%s735] sm:$0xff] %vm303, %v730
        %737 = vst.msk [vmem:[%s735 + $0x8] sm:$0xff] %vm303, %v732
        %738 = vrot.lane.b32.xlu0 %v501, 120
        %v739 = vpop.permute.xlu0 %738
        %740 = vrot.lane.b32.xlu0 %v506, 120
        %v741 = vpop.permute.xlu0 %740
        %s744 = scalar_lea.vmem %s224, 224
        %745 = vst.msk [vmem:[%s744] sm:$0xff] %vm303, %v739
        %746 = vst.msk [vmem:[%s744 + $0x8] sm:$0xff] %vm303, %v741
        %747 = vrot.lane.b32.xlu0 %v501, 116
        %v748 = vpop.permute.xlu0 %747
        %749 = vrot.lane.b32.xlu0 %v506, 116
        %v750 = vpop.permute.xlu0 %749
        %s753 = scalar_lea.vmem %s224, 240
        %754 = vst.msk [vmem:[%s753] sm:$0xff] %vm303, %v748
        %755 = vst.msk [vmem:[%s753 + $0x8] sm:$0xff] %vm303, %v750
        %s756 = scalar_lea.vmem %s224, 256
        %757 = vst.msk [vmem:[%s756] sm:$0xff] %vm303, %v511
        %758 = vst.msk [vmem:[%s756 + $0x8] sm:$0xff] %vm303, %v516
        %761 = vrot.lane.b32.xlu0 %v511, 124
        %v762 = vpop.permute.xlu0 %761
        %763 = vrot.lane.b32.xlu0 %v516, 124
        %v764 = vpop.permute.xlu0 %763
        %s767 = scalar_lea.vmem %s224, 272
        %768 = vst.msk [vmem:[%s767] sm:$0xff] %vm303, %v762
        %769 = vst.msk [vmem:[%s767 + $0x8] sm:$0xff] %vm303, %v764
        %770 = vrot.lane.b32.xlu0 %v511, 120
        %v771 = vpop.permute.xlu0 %770
        %772 = vrot.lane.b32.xlu0 %v516, 120
        %v773 = vpop.permute.xlu0 %772
        %s776 = scalar_lea.vmem %s224, 288
        %777 = vst.msk [vmem:[%s776] sm:$0xff] %vm303, %v771
        %778 = vst.msk [vmem:[%s776 + $0x8] sm:$0xff] %vm303, %v773
        %779 = vrot.lane.b32.xlu0 %v511, 116
        %v780 = vpop.permute.xlu0 %779
        %781 = vrot.lane.b32.xlu0 %v516, 116
        %v782 = vpop.permute.xlu0 %781
        %s785 = scalar_lea.vmem %s224, 304
        %786 = vst.msk [vmem:[%s785] sm:$0xff] %vm303, %v780
        %787 = vst.msk [vmem:[%s785 + $0x8] sm:$0xff] %vm303, %v782
        %s788 = scalar_lea.vmem %s224, 320
        %789 = vst.msk [vmem:[%s788] sm:$0xff] %vm303, %v521
        %790 = vst.msk [vmem:[%s788 + $0x8] sm:$0xff] %vm303, %v526
        %793 = vrot.lane.b32.xlu0 %v521, 124
        %v794 = vpop.permute.xlu0 %793
        %795 = vrot.lane.b32.xlu0 %v526, 124
        %v796 = vpop.permute.xlu0 %795
        %s799 = scalar_lea.vmem %s224, 336
        %800 = vst.msk [vmem:[%s799] sm:$0xff] %vm303, %v794
        %801 = vst.msk [vmem:[%s799 + $0x8] sm:$0xff] %vm303, %v796
        %802 = vrot.lane.b32.xlu0 %v521, 120
        %v803 = vpop.permute.xlu0 %802
        %804 = vrot.lane.b32.xlu0 %v526, 120
        %v805 = vpop.permute.xlu0 %804
        %s808 = scalar_lea.vmem %s224, 352
        %809 = vst.msk [vmem:[%s808] sm:$0xff] %vm303, %v803
        %810 = vst.msk [vmem:[%s808 + $0x8] sm:$0xff] %vm303, %v805
        %811 = vrot.lane.b32.xlu0 %v521, 116
        %v812 = vpop.permute.xlu0 %811
        %813 = vrot.lane.b32.xlu0 %v526, 116
        %v814 = vpop.permute.xlu0 %813
        %s817 = scalar_lea.vmem %s224, 368
        %818 = vst.msk [vmem:[%s817] sm:$0xff] %vm303, %v812
        %819 = vst.msk [vmem:[%s817 + $0x8] sm:$0xff] %vm303, %v814
        %s820 = scalar_lea.vmem %s224, 384
        %821 = vst.msk [vmem:[%s820] sm:$0xff] %vm303, %v531
        %822 = vst.msk [vmem:[%s820 + $0x8] sm:$0xff] %vm303, %v536
        %825 = vrot.lane.b32.xlu0 %v531, 124
        %v826 = vpop.permute.xlu0 %825
        %827 = vrot.lane.b32.xlu0 %v536, 124
        %v828 = vpop.permute.xlu0 %827
        %s831 = scalar_lea.vmem %s224, 400
        %832 = vst.msk [vmem:[%s831] sm:$0xff] %vm303, %v826
        %833 = vst.msk [vmem:[%s831 + $0x8] sm:$0xff] %vm303, %v828
        %834 = vrot.lane.b32.xlu0 %v531, 120
        %v835 = vpop.permute.xlu0 %834
        %836 = vrot.lane.b32.xlu0 %v536, 120
        %v837 = vpop.permute.xlu0 %836
        %s840 = scalar_lea.vmem %s224, 416
        %841 = vst.msk [vmem:[%s840] sm:$0xff] %vm303, %v835
        %842 = vst.msk [vmem:[%s840 + $0x8] sm:$0xff] %vm303, %v837
        %843 = vrot.lane.b32.xlu0 %v531, 116
        %v844 = vpop.permute.xlu0 %843
        %845 = vrot.lane.b32.xlu0 %v536, 116
        %v846 = vpop.permute.xlu0 %845
        %s849 = scalar_lea.vmem %s224, 432
        %850 = vst.msk [vmem:[%s849] sm:$0xff] %vm303, %v844
        %851 = vst.msk [vmem:[%s849 + $0x8] sm:$0xff] %vm303, %v846
        %s852 = scalar_lea.vmem %s224, 448
        %853 = vst.msk [vmem:[%s852] sm:$0xff] %vm303, %v541
        %854 = vst.msk [vmem:[%s852 + $0x8] sm:$0xff] %vm303, %v546
        %857 = vrot.lane.b32.xlu0 %v541, 124
        %v858 = vpop.permute.xlu0 %857
        %859 = vrot.lane.b32.xlu0 %v546, 124
        %v860 = vpop.permute.xlu0 %859
        %s863 = scalar_lea.vmem %s224, 464
        %864 = vst.msk [vmem:[%s863] sm:$0xff] %vm303, %v858
        %865 = vst.msk [vmem:[%s863 + $0x8] sm:$0xff] %vm303, %v860
        %866 = vrot.lane.b32.xlu0 %v541, 120
        %v867 = vpop.permute.xlu0 %866
        %868 = vrot.lane.b32.xlu0 %v546, 120
        %v869 = vpop.permute.xlu0 %868
        %s872 = scalar_lea.vmem %s224, 480
        %873 = vst.msk [vmem:[%s872] sm:$0xff] %vm303, %v867
        %874 = vst.msk [vmem:[%s872 + $0x8] sm:$0xff] %vm303, %v869
        %875 = vrot.lane.b32.xlu0 %v541, 116
        %v876 = vpop.permute.xlu0 %875
        %877 = vrot.lane.b32.xlu0 %v546, 116
        %v878 = vpop.permute.xlu0 %877
        %s881 = scalar_lea.vmem %s224, 496
        %882 = vst.msk [vmem:[%s881] sm:$0xff] %vm303, %v876
        %883 = vst.msk [vmem:[%s881 + $0x8] sm:$0xff] %vm303, %v878
        %s884 = scalar_lea.vmem %s224, 512
        %885 = vst.msk [vmem:[%s884] sm:$0xff] %vm303, %v551
        %886 = vst.msk [vmem:[%s884 + $0x8] sm:$0xff] %vm303, %v556
        %889 = vrot.lane.b32.xlu0 %v551, 124
        %v890 = vpop.permute.xlu0 %889
        %891 = vrot.lane.b32.xlu0 %v556, 124
        %v892 = vpop.permute.xlu0 %891
        %s895 = scalar_lea.vmem %s224, 528
        %896 = vst.msk [vmem:[%s895] sm:$0xff] %vm303, %v890
        %897 = vst.msk [vmem:[%s895 + $0x8] sm:$0xff] %vm303, %v892
        %898 = vrot.lane.b32.xlu0 %v551, 120
        %v899 = vpop.permute.xlu0 %898
        %900 = vrot.lane.b32.xlu0 %v556, 120
        %v901 = vpop.permute.xlu0 %900
        %s904 = scalar_lea.vmem %s224, 544
        %905 = vst.msk [vmem:[%s904] sm:$0xff] %vm303, %v899
        %906 = vst.msk [vmem:[%s904 + $0x8] sm:$0xff] %vm303, %v901
        %907 = vrot.lane.b32.xlu0 %v551, 116
        %v908 = vpop.permute.xlu0 %907
        %909 = vrot.lane.b32.xlu0 %v556, 116
        %v910 = vpop.permute.xlu0 %909
        %s913 = scalar_lea.vmem %s224, 560
        %914 = vst.msk [vmem:[%s913] sm:$0xff] %vm303, %v908
        %915 = vst.msk [vmem:[%s913 + $0x8] sm:$0xff] %vm303, %v910
        %s916 = scalar_lea.vmem %s224, 576
        %917 = vst.msk [vmem:[%s916] sm:$0xff] %vm303, %v561
        %918 = vst.msk [vmem:[%s916 + $0x8] sm:$0xff] %vm303, %v566
        %921 = vrot.lane.b32.xlu0 %v561, 124
        %v922 = vpop.permute.xlu0 %921
        %923 = vrot.lane.b32.xlu0 %v566, 124
        %v924 = vpop.permute.xlu0 %923
        %s927 = scalar_lea.vmem %s224, 592
        %928 = vst.msk [vmem:[%s927] sm:$0xff] %vm303, %v922
        %929 = vst.msk [vmem:[%s927 + $0x8] sm:$0xff] %vm303, %v924
        %930 = vrot.lane.b32.xlu0 %v561, 120
        %v931 = vpop.permute.xlu0 %930
        %932 = vrot.lane.b32.xlu0 %v566, 120
        %v933 = vpop.permute.xlu0 %932
        %s936 = scalar_lea.vmem %s224, 608
        %937 = vst.msk [vmem:[%s936] sm:$0xff] %vm303, %v931
        %938 = vst.msk [vmem:[%s936 + $0x8] sm:$0xff] %vm303, %v933
        %939 = vrot.lane.b32.xlu0 %v561, 116
        %v940 = vpop.permute.xlu0 %939
        %941 = vrot.lane.b32.xlu0 %v566, 116
        %v942 = vpop.permute.xlu0 %941
        %s945 = scalar_lea.vmem %s224, 624
        %946 = vst.msk [vmem:[%s945] sm:$0xff] %vm303, %v940
        %947 = vst.msk [vmem:[%s945 + $0x8] sm:$0xff] %vm303, %v942
        %s948 = scalar_lea.vmem %s224, 640
        %949 = vst.msk [vmem:[%s948] sm:$0xff] %vm303, %v571
        %950 = vst.msk [vmem:[%s948 + $0x8] sm:$0xff] %vm303, %v576
        %953 = vrot.lane.b32.xlu0 %v571, 124
        %v954 = vpop.permute.xlu0 %953
        %955 = vrot.lane.b32.xlu0 %v576, 124
        %v956 = vpop.permute.xlu0 %955
        %s959 = scalar_lea.vmem %s224, 656
        %960 = vst.msk [vmem:[%s959] sm:$0xff] %vm303, %v954
        %961 = vst.msk [vmem:[%s959 + $0x8] sm:$0xff] %vm303, %v956
        %962 = vrot.lane.b32.xlu0 %v571, 120
        %v963 = vpop.permute.xlu0 %962
        %964 = vrot.lane.b32.xlu0 %v576, 120
        %v965 = vpop.permute.xlu0 %964
        %s968 = scalar_lea.vmem %s224, 672
        %969 = vst.msk [vmem:[%s968] sm:$0xff] %vm303, %v963
        %970 = vst.msk [vmem:[%s968 + $0x8] sm:$0xff] %vm303, %v965
        %971 = vrot.lane.b32.xlu0 %v571, 116
        %v972 = vpop.permute.xlu0 %971
        %973 = vrot.lane.b32.xlu0 %v576, 116
        %v974 = vpop.permute.xlu0 %973
        %s977 = scalar_lea.vmem %s224, 688
        %978 = vst.msk [vmem:[%s977] sm:$0xff] %vm303, %v972
        %979 = vst.msk [vmem:[%s977 + $0x8] sm:$0xff] %vm303, %v974
        %s980 = scalar_lea.vmem %s224, 704
        %981 = vst.msk [vmem:[%s980] sm:$0xff] %vm303, %v581
        %982 = vst.msk [vmem:[%s980 + $0x8] sm:$0xff] %vm303, %v586
        %985 = vrot.lane.b32.xlu0 %v581, 124
        %v986 = vpop.permute.xlu0 %985
        %987 = vrot.lane.b32.xlu0 %v586, 124
        %v988 = vpop.permute.xlu0 %987
        %s991 = scalar_lea.vmem %s224, 720
        %992 = vst.msk [vmem:[%s991] sm:$0xff] %vm303, %v986
        %993 = vst.msk [vmem:[%s991 + $0x8] sm:$0xff] %vm303, %v988
        %994 = vrot.lane.b32.xlu0 %v581, 120
        %v995 = vpop.permute.xlu0 %994
        %996 = vrot.lane.b32.xlu0 %v586, 120
        %v997 = vpop.permute.xlu0 %996
        %s1000 = scalar_lea.vmem %s224, 736
        %1001 = vst.msk [vmem:[%s1000] sm:$0xff] %vm303, %v995
        %1002 = vst.msk [vmem:[%s1000 + $0x8] sm:$0xff] %vm303, %v997
        %1003 = vrot.lane.b32.xlu0 %v581, 116
        %v1004 = vpop.permute.xlu0 %1003
        %1005 = vrot.lane.b32.xlu0 %v586, 116
        %v1006 = vpop.permute.xlu0 %1005
        %s1009 = scalar_lea.vmem %s224, 752
        %1010 = vst.msk [vmem:[%s1009] sm:$0xff] %vm303, %v1004
        %1011 = vst.msk [vmem:[%s1009 + $0x8] sm:$0xff] %vm303, %v1006
        %s1012 = scalar_lea.vmem %s224, 768
        %1013 = vst.msk [vmem:[%s1012] sm:$0xff] %vm303, %v591
        %1014 = vst.msk [vmem:[%s1012 + $0x8] sm:$0xff] %vm303, %v596
        %1017 = vrot.lane.b32.xlu0 %v591, 124
        %v1018 = vpop.permute.xlu0 %1017
        %1019 = vrot.lane.b32.xlu0 %v596, 124
        %v1020 = vpop.permute.xlu0 %1019
        %s1023 = scalar_lea.vmem %s224, 784
        %1024 = vst.msk [vmem:[%s1023] sm:$0xff] %vm303, %v1018
        %1025 = vst.msk [vmem:[%s1023 + $0x8] sm:$0xff] %vm303, %v1020
        %1026 = vrot.lane.b32.xlu0 %v591, 120
        %v1027 = vpop.permute.xlu0 %1026
        %1028 = vrot.lane.b32.xlu0 %v596, 120
        %v1029 = vpop.permute.xlu0 %1028
        %s1032 = scalar_lea.vmem %s224, 800
        %1033 = vst.msk [vmem:[%s1032] sm:$0xff] %vm303, %v1027
        %1034 = vst.msk [vmem:[%s1032 + $0x8] sm:$0xff] %vm303, %v1029
        %1035 = vrot.lane.b32.xlu0 %v591, 116
        %v1036 = vpop.permute.xlu0 %1035
        %1037 = vrot.lane.b32.xlu0 %v596, 116
        %v1038 = vpop.permute.xlu0 %1037
        %s1041 = scalar_lea.vmem %s224, 816
        %1042 = vst.msk [vmem:[%s1041] sm:$0xff] %vm303, %v1036
        %1043 = vst.msk [vmem:[%s1041 + $0x8] sm:$0xff] %vm303, %v1038
        %s1044 = scalar_lea.vmem %s224, 832
        %1045 = vst.msk [vmem:[%s1044] sm:$0xff] %vm303, %v601
        %1046 = vst.msk [vmem:[%s1044 + $0x8] sm:$0xff] %vm303, %v606
        %1049 = vrot.lane.b32.xlu0 %v601, 124
        %v1050 = vpop.permute.xlu0 %1049
        %1051 = vrot.lane.b32.xlu0 %v606, 124
        %v1052 = vpop.permute.xlu0 %1051
        %s1055 = scalar_lea.vmem %s224, 848
        %1056 = vst.msk [vmem:[%s1055] sm:$0xff] %vm303, %v1050
        %1057 = vst.msk [vmem:[%s1055 + $0x8] sm:$0xff] %vm303, %v1052
        %1058 = vrot.lane.b32.xlu0 %v601, 120
        %v1059 = vpop.permute.xlu0 %1058
        %1060 = vrot.lane.b32.xlu0 %v606, 120
        %v1061 = vpop.permute.xlu0 %1060
        %s1064 = scalar_lea.vmem %s224, 864
        %1065 = vst.msk [vmem:[%s1064] sm:$0xff] %vm303, %v1059
        %1066 = vst.msk [vmem:[%s1064 + $0x8] sm:$0xff] %vm303, %v1061
        %1067 = vrot.lane.b32.xlu0 %v601, 116
        %v1068 = vpop.permute.xlu0 %1067
        %1069 = vrot.lane.b32.xlu0 %v606, 116
        %v1070 = vpop.permute.xlu0 %1069
        %s1073 = scalar_lea.vmem %s224, 880
        %1074 = vst.msk [vmem:[%s1073] sm:$0xff] %vm303, %v1068
        %1075 = vst.msk [vmem:[%s1073 + $0x8] sm:$0xff] %vm303, %v1070
        %s1076 = scalar_lea.vmem %s224, 896
        %1077 = vst.msk [vmem:[%s1076] sm:$0xff] %vm303, %v611
        %1078 = vst.msk [vmem:[%s1076 + $0x8] sm:$0xff] %vm303, %v616
        %1081 = vrot.lane.b32.xlu0 %v611, 124
        %v1082 = vpop.permute.xlu0 %1081
        %1083 = vrot.lane.b32.xlu0 %v616, 124
        %v1084 = vpop.permute.xlu0 %1083
        %s1087 = scalar_lea.vmem %s224, 912
        %1088 = vst.msk [vmem:[%s1087] sm:$0xff] %vm303, %v1082
        %1089 = vst.msk [vmem:[%s1087 + $0x8] sm:$0xff] %vm303, %v1084
        %1090 = vrot.lane.b32.xlu0 %v611, 120
        %v1091 = vpop.permute.xlu0 %1090
        %1092 = vrot.lane.b32.xlu0 %v616, 120
        %v1093 = vpop.permute.xlu0 %1092
        %s1096 = scalar_lea.vmem %s224, 928
        %1097 = vst.msk [vmem:[%s1096] sm:$0xff] %vm303, %v1091
        %1098 = vst.msk [vmem:[%s1096 + $0x8] sm:$0xff] %vm303, %v1093
        %1099 = vrot.lane.b32.xlu0 %v611, 116
        %v1100 = vpop.permute.xlu0 %1099
        %1101 = vrot.lane.b32.xlu0 %v616, 116
        %v1102 = vpop.permute.xlu0 %1101
        %s1105 = scalar_lea.vmem %s224, 944
        %1106 = vst.msk [vmem:[%s1105] sm:$0xff] %vm303, %v1100
        %1107 = vst.msk [vmem:[%s1105 + $0x8] sm:$0xff] %vm303, %v1102
        %s1108 = scalar_lea.vmem %s224, 960
        %1109 = vst.msk [vmem:[%s1108] sm:$0xff] %vm303, %v621
        %1110 = vst.msk [vmem:[%s1108 + $0x8] sm:$0xff] %vm303, %v626
        %1113 = vrot.lane.b32.xlu0 %v621, 124
        %v1114 = vpop.permute.xlu0 %1113
        %1115 = vrot.lane.b32.xlu0 %v626, 124
        %v1116 = vpop.permute.xlu0 %1115
        %s1119 = scalar_lea.vmem %s224, 976
        %1120 = vst.msk [vmem:[%s1119] sm:$0xff] %vm303, %v1114
        %1121 = vst.msk [vmem:[%s1119 + $0x8] sm:$0xff] %vm303, %v1116
        %1122 = vrot.lane.b32.xlu0 %v621, 120
        %v1123 = vpop.permute.xlu0 %1122
        %1124 = vrot.lane.b32.xlu0 %v626, 120
        %v1125 = vpop.permute.xlu0 %1124
        %s1128 = scalar_lea.vmem %s224, 992
        %1129 = vst.msk [vmem:[%s1128] sm:$0xff] %vm303, %v1123
        %1130 = vst.msk [vmem:[%s1128 + $0x8] sm:$0xff] %vm303, %v1125
        %1131 = vrot.lane.b32.xlu0 %v621, 116
        %v1132 = vpop.permute.xlu0 %1131
        %1133 = vrot.lane.b32.xlu0 %v626, 116
        %v1134 = vpop.permute.xlu0 %1133
        %s1137 = scalar_lea.vmem %s224, 1008
        %1138 = vst.msk [vmem:[%s1137] sm:$0xff] %vm303, %v1132
        %1139 = vst.msk [vmem:[%s1137 + $0x8] sm:$0xff] %vm303, %v1134
        %s1140 = sadd.s32 %s22, %s23
        %s1141 = smul.u32 16, %s1140
        %p1142 = scmp.lt.s32.totalorder %s1141, 31
        %s1143 = scalar_select %p1142, %s1141, 31
        %s1144 = smul.addr %s1143, 8
        %s1145 = smul.addr %s1144, 8
        %s1146 = scalar_lea.vmem %s3, %s1145
        // Predicated region
        $region41: #{tpu_custom_call.1} parent=31 // pred_check
          %p1147 = pneg %p120
        $region42: #{tpu_custom_call.1} parent=31 // pred_check_branch
          %1149 = sbr.rel (%p1147) target = $region44
        $region43: #{tpu_custom_call.1} parent=31 // pred_region
          %s1150 = sadd.s32 %s22, %s23
          %s1151 = smul.u32 16, %s1150
        $region44: #{tpu_custom_call.1} parent=31 // pred_fallthru
          _
      $region32: #{tpu_custom_call.1} parent=5 // pred_fallthru
        _
      %p1152 = scmp.le.s32.totalorder 2, %s13
      // Predicated region
      $region45: #{tpu_custom_call.1} parent=5 // pred_check
        %p1153 = pneg %p1152
      $region46: #{tpu_custom_call.1} parent=5 // pred_check_branch
        %1155 = sbr.rel (%p1153) target = $region48
      $region47: #{tpu_custom_call.1} parent=5 // pred_region
        %s1156 = ssub.s32 %s13, 2
        // Predicated region
        $region49: #{tpu_custom_call.1} parent=47 // pred_check
          %p1157 = pneg %p126
        $region50: #{tpu_custom_call.1} parent=47 // pred_check_branch
          %1159 = sbr.rel (%p1157) target = $region52
        $region51: #{tpu_custom_call.1} parent=47 // pred_region
          %s1160 = sadd.s32 %s24, %s25
          %s1161 = smul.u32 16, %s1160
          %p1162 = scmp.lt.s32.totalorder %s1161, 31
          %s1163 = scalar_select %p1162, %s1161, 31
          %s1164 = smul.addr %s1163, 8
          %s1165 = smul.addr %s1164, 8
          %s1166 = scalar_lea.vmem %s3, %s1165
        $region52: #{tpu_custom_call.1} parent=47 // pred_fallthru
          _
      $region48: #{tpu_custom_call.1} parent=5 // pred_fallthru
        _
    $region6: #{tpu_custom_call.1} parent=1 // loop_footer
      %s17 = sadd.s32 1, %s13
    $region7: #{tpu_custom_call.1} parent=1 // loop_footer_branch
      %12 = sbr.rel target = $region3
    $region8: #{tpu_custom_call.1} parent=1 // loop_exit
      _
    %1167 = vsyncpa [#allocation3], 1
    %s1168 = scalar_lea.sflag [#allocation3], 1
    %1169 = vsyncpa %s1168, 1
    %1170 = vsyncpa [#allocation5], 1

</llo_original>
